<compile_context>
chip_gen: v7x
topology: tpu7x:2x2x1
jax: 0.10.0
libtpu: 0.0.40
codegen_flags: <defaults>
</compile_context>

<pallas_src>
import math

import jax
import jax.numpy as jnp
from jax import lax
from jax.experimental import pallas as pl
from jax.experimental.pallas import tpu as pltpu

# ---------------- problem sizes (small, but layout-friendly) ----------------
B = 2            # batch
NUM_QUERIES = 8  # num_queries == sequence length S (required for .expand to be valid)
S = NUM_QUERIES
E = 256          # embed_dim
H = 2            # num_heads
Dh = E // H      # head dim (=128, lane aligned)


def _attention_mapper_kernel(x_ref, wqkv_ref, bqkv_ref, wo_ref, bo_ref, out_ref):
    # x block: (B, S, E) f32 -> flatten batch rows, cast ONCE to bf16 (16 KiB).
    x = x_ref[...].reshape(B * S, E).astype(jnp.bfloat16)

    # Single fused q/k/v projection: bf16 x bf16 MXU dot, f32 accumulation,
    # f32 bias.  1/sqrt(Dh) is pre-folded into the q columns of wqkv/bqkv.
    qkv = jnp.dot(x, wqkv_ref[...], preferred_element_type=jnp.float32) + bqkv_ref[...]

    # Out-projection weight/bias loaded once, hoisted out of the unrolled loops.
    wo = wo_ref[...]          # (E, E) bf16
    bo = bo_ref[...]          # (1, E) f32

    for b in range(B):                               # static unroll (B = 2)
        r0 = b * S
        heads = []
        for h in range(H):                           # static unroll (H = 2)
            lo = h * Dh
            # 128-lane-aligned slices of the fused projection result.
            qh = qkv[r0:r0 + S, lo:lo + Dh].astype(jnp.bfloat16)            # scaled q
            kh = qkv[r0:r0 + S, E + lo:E + lo + Dh].astype(jnp.bfloat16)
            vh = qkv[r0:r0 + S, 2 * E + lo:2 * E + lo + Dh].astype(jnp.bfloat16)
            # Contract last dims of both operands -> no (Dh, S) transpose/relayout.
            s = lax.dot_general(qh, kh, (((1,), (1,)), ((), ())),
                                preferred_element_type=jnp.float32)         # (S, S)
            s = s - jnp.max(s, axis=-1, keepdims=True)
            p = jnp.exp(s)
            p = p * pl.reciprocal(jnp.sum(p, axis=-1, keepdims=True), approx=True)
            oh = jnp.dot(p.astype(jnp.bfloat16), vh,
                         preferred_element_type=jnp.float32)                # (S, Dh)
            heads.append(oh.astype(jnp.bfloat16))
        # Lane-aligned head concat -> ONE K=256 out-projection matmul per batch.
        oh_full = jnp.concatenate(heads, axis=-1)                           # (S, E) bf16
        y = jnp.dot(oh_full, wo, preferred_element_type=jnp.float32) + bo   # (S, E) f32
        # Output already in (S, B*E) order; lane-dense store at 256-aligned offset.
        out_ref[:, b * E:(b + 1) * E] = y.astype(out_ref.dtype)


def attention_mapper_forward(x, fp):
    """x: (B, S, E) float32. fp: folded params. Returns (num_queries, B, 1, E)."""
    b, s, e = x.shape
    assert (b, s, e) == (B, S, E)

    wqkv, bqkv, wo, bo = fp["wqkv"], fp["bqkv"], fp["wo"], fp["bo"]

    # Advisory cost estimate so XLA schedules this tiny DMA-bound call sanely.
    flops = (2 * B * S * E * 3 * E            # fused qkv projection
             + 2 * B * H * (2 * S * S * Dh)   # scores + p@v
             + 2 * B * S * E * E)             # out projection
    transcendentals = B * H * S * S + B * H * S
    bytes_accessed = (int(wqkv.size) * wqkv.dtype.itemsize
                      + int(bqkv.size) * bqkv.dtype.itemsize
                      + int(wo.size) * wo.dtype.itemsize
                      + int(bo.size) * bo.dtype.itemsize
                      + int(x.size) * x.dtype.itemsize
                      + S * B * E * x.dtype.itemsize)

    out = pl.pallas_call(
        _attention_mapper_kernel,
        out_shape=jax.ShapeDtypeStruct((S, B * E), x.dtype),
        grid=(1,),   # single invocation on every chip: weight DMA is not duplicated
        in_specs=[
            pl.BlockSpec((B, S, E), lambda i: (0, 0, 0)),     # x
            pl.BlockSpec((E, 3 * E), lambda i: (0, 0)),       # wqkv (bf16)
            pl.BlockSpec((1, 3 * E), lambda i: (0, 0)),       # bqkv (f32)
            pl.BlockSpec((E, E), lambda i: (0, 0)),           # wo   (bf16)
            pl.BlockSpec((1, E), lambda i: (0, 0)),           # bo   (f32)
        ],
        out_specs=pl.BlockSpec((S, B * E), lambda i: (0, 0)),
        compiler_params=pltpu.CompilerParams(dimension_semantics=("arbitrary",)),
        cost_estimate=pl.CostEstimate(flops=flops,
                                      transcendentals=transcendentals,
                                      bytes_accessed=bytes_accessed),
    )(x, wqkv, bqkv, wo, bo)

    # (S, B*E) row-major is exactly (num_queries, B, 1, E) row-major:
    # pure metadata reshape, no transpose / broadcast copy dispatch.
    return out.reshape(NUM_QUERIES, b, 1, E)


def init_params(key):
    """Deterministic synthetic parameters (PyTorch Linear weights are (out,in);
    we store them pre-transposed as (in,out)). Biases stored as (1, E), f32."""
    ks = jax.random.split(key, 14)
    scale = 1.0 / math.sqrt(E)

    def w(k):
        return jax.random.normal(k, (E, E), jnp.float32) * scale

    def bias(k):
        return jax.random.normal(k, (1, E), jnp.float32) * scale

    names = ["wq1", "bq1", "wk1", "bk1", "wv1", "bv1",
             "wqi", "bqi", "wki", "bki", "wvi", "bvi", "wo", "bo"]
    return {n: (w(k) if n.startswith("w") else bias(k)) for n, k in zip(names, ks)}


def fold_params(params, weight_dtype=jnp.bfloat16):
    """Fold outer Linear + MHA in-proj into one affine map per q/k/v (exact
    composition of two linear layers), fold the 1/sqrt(Dh) query scale into the
    q weights/bias, concatenate q/k/v into ONE (E, 3E) weight / (1, 3E) bias,
    and cast weights to bf16 (folding math in f32; biases stay f32)."""
    qscale = 1.0 / math.sqrt(Dh)

    def fold(w1, b1, wi, bi, s=1.0):
        w = (w1 @ wi) * s                       # f32 compose
        bf = (b1 @ wi + bi) * s                 # f32 folded bias
        return w, bf

    wq, bq = fold(params["wq1"], params["bq1"], params["wqi"], params["bqi"], qscale)
    wk, bk = fold(params["wk1"], params["bk1"], params["wki"], params["bki"])
    wv, bv = fold(params["wv1"], params["bv1"], params["wvi"], params["bvi"])
    wqkv = jnp.concatenate([wq, wk, wv], axis=1).astype(weight_dtype)   # (E, 3E)
    bqkv = jnp.concatenate([bq, bk, bv], axis=1).astype(jnp.float32)    # (1, 3E)
    return {"wqkv": wqkv, "bqkv": bqkv,
            "wo": params["wo"].astype(weight_dtype),
            "bo": params["bo"].astype(jnp.float32)}


def reference_forward(x, params):
    """Pure-JAX f32 reference with the UNFOLDED params, matching PyTorch semantics."""
    def lin(inp, w, bb):
        return inp @ w + bb
    q1 = lin(x, params["wq1"], params["bq1"])
    k1 = lin(x, params["wk1"], params["bk1"])
    v1 = lin(x, params["wv1"], params["bv1"])
    q = lin(q1, params["wqi"], params["bqi"])
    k = lin(k1, params["wki"], params["bki"])
    v = lin(v1, params["wvi"], params["bvi"])
    qh = q.reshape(B, S, H, Dh).transpose(0, 2, 1, 3) / math.sqrt(Dh)
    kh = k.reshape(B, S, H, Dh).transpose(0, 2, 1, 3)
    vh = v.reshape(B, S, H, Dh).transpose(0, 2, 1, 3)
    s = jnp.einsum("bhqd,bhkd->bhqk", qh, kh)
    p = jax.nn.softmax(s, axis=-1)
    a = jnp.einsum("bhqk,bhkd->bhqd", p, vh).transpose(0, 2, 1, 3).reshape(B, S, E)
    y = lin(a, params["wo"], params["bo"])
    y = jnp.broadcast_to(y[:, :, None, :], (B, NUM_QUERIES, 1, E))
    return jnp.transpose(y, (1, 0, 2, 3))


if __name__ == "__main__":
    key = jax.random.PRNGKey(0)
    kx, kp = jax.random.split(key)
    x = jax.random.normal(kx, (B, S, E), jnp.float32)
    params = init_params(kp)
    fp = fold_params(params)          # fused (E,3E)+(E,E) bf16 weights, scale folded in

    out = jax.block_until_ready(attention_mapper_forward(x, fp))
    ref = jax.block_until_ready(reference_forward(x, params))

    assert out.shape == (NUM_QUERIES, B, 1, E), out.shape
    err = float(jnp.max(jnp.abs(out - ref)))
    # bf16 weights AND bf16 activations in-kernel (f32 accumulation) -> loosened tol.
    assert err < 5e-2, err
    print("KERNEL_OK")
</pallas_src>

<mosaic_0001>
module attributes {stable_mosaic.version = 11 : i64} {
  func.func @_attention_mapper_kernel(%arg0: i32, %arg1: memref<2x8x256xf32, #tpu.memory_space<vmem>>, %arg2: memref<256x768xbf16, #tpu.memory_space<vmem>>, %arg3: memref<1x768xf32, #tpu.memory_space<vmem>>, %arg4: memref<256x256xbf16, #tpu.memory_space<vmem>>, %arg5: memref<1x256xf32, #tpu.memory_space<vmem>>, %arg6: memref<8x512xf32, #tpu.memory_space<vmem>>) attributes {dimension_semantics = [#tpu.dimension_semantics<arbitrary>], iteration_bounds = array<i64: 1>, scalar_prefetch = 0 : i64, scratch_operands = 0 : i64, tpu.core_type = #tpu.core_type<tc>, window_params = [{pipeline_mode = #tpu.pipeline_mode<synchronous>, transform_indices = @transform_0, window_bounds = array<i64: 2, 8, 256>}, {pipeline_mode = #tpu.pipeline_mode<synchronous>, transform_indices = @transform_1, window_bounds = array<i64: 256, 768>}, {pipeline_mode = #tpu.pipeline_mode<synchronous>, transform_indices = @transform_2, window_bounds = array<i64: 1, 768>}, {pipeline_mode = #tpu.pipeline_mode<synchronous>, transform_indices = @transform_3, window_bounds = array<i64: 256, 256>}, {pipeline_mode = #tpu.pipeline_mode<synchronous>, transform_indices = @transform_4, window_bounds = array<i64: 1, 256>}, {pipeline_mode = #tpu.pipeline_mode<synchronous>, transform_indices = @transform_5, window_bounds = array<i64: 8, 512>}]} {
    %c0 = arith.constant 0 : index
    %c0_0 = arith.constant 0 : index
    %c0_1 = arith.constant 0 : index
    %0 = vector.load %arg1[%c0, %c0_0, %c0_1] : memref<2x8x256xf32, #tpu.memory_space<vmem>>, vector<2x8x256xf32>
    %1 = vector.shape_cast %0 : vector<2x8x256xf32> to vector<16x256xf32>
    %2 = arith.truncf %1 : vector<16x256xf32> to vector<16x256xbf16>
    %c0_2 = arith.constant 0 : index
    %c0_3 = arith.constant 0 : index
    %3 = vector.load %arg2[%c0_2, %c0_3] : memref<256x768xbf16, #tpu.memory_space<vmem>>, vector<256x768xbf16>
    %cst = arith.constant dense<0.000000e+00> : vector<16x768xf32>
    %4 = tpu.matmul %2, %3, %cst {dimension_numbers = #tpu.dot_dimension_numbers<[1], [0], [0], [1], [0, 0, 1, 1], [], []>} : vector<16x256xbf16>, vector<256x768xbf16>, vector<16x768xf32> -> vector<16x768xf32>
    %c0_4 = arith.constant 0 : index
    %c0_5 = arith.constant 0 : index
    %5 = vector.load %arg3[%c0_4, %c0_5] : memref<1x768xf32, #tpu.memory_space<vmem>>, vector<1x768xf32>
    %6 = vector.broadcast %5 : vector<1x768xf32> to vector<16x768xf32>
    %7 = arith.addf %4, %6 : vector<16x768xf32>
    %c0_6 = arith.constant 0 : index
    %c0_7 = arith.constant 0 : index
    %8 = vector.load %arg4[%c0_6, %c0_7] : memref<256x256xbf16, #tpu.memory_space<vmem>>, vector<256x256xbf16>
    %c0_8 = arith.constant 0 : index
    %c0_9 = arith.constant 0 : index
    %9 = vector.load %arg5[%c0_8, %c0_9] : memref<1x256xf32, #tpu.memory_space<vmem>>, vector<1x256xf32>
    %10 = vector.extract_strided_slice %7 {offsets = [0, 0], sizes = [8, 128], strides = [1, 1]} : vector<16x768xf32> to vector<8x128xf32>
    %11 = arith.truncf %10 : vector<8x128xf32> to vector<8x128xbf16>
    %12 = vector.extract_strided_slice %7 {offsets = [0, 256], sizes = [8, 128], strides = [1, 1]} : vector<16x768xf32> to vector<8x128xf32>
    %13 = arith.truncf %12 : vector<8x128xf32> to vector<8x128xbf16>
    %14 = vector.extract_strided_slice %7 {offsets = [0, 512], sizes = [8, 128], strides = [1, 1]} : vector<16x768xf32> to vector<8x128xf32>
    %15 = arith.truncf %14 : vector<8x128xf32> to vector<8x128xbf16>
    %cst_10 = arith.constant dense<0.000000e+00> : vector<8x8xf32>
    %16 = tpu.matmul %11, %13, %cst_10 {dimension_numbers = #tpu.dot_dimension_numbers<[1], [1], [0], [0], [0, 0, 1, 0], [], []>} : vector<8x128xbf16>, vector<8x128xbf16>, vector<8x8xf32> -> vector<8x8xf32>
    %cst_11 = arith.constant dense<0xFF800000> : vector<8xf32>
    %17 = vector.multi_reduction <maximumf>, %16, %cst_11 [1] : vector<8x8xf32> to vector<8xf32>
    %18 = vector.shape_cast %17 : vector<8xf32> to vector<8x1xf32>
    %19 = vector.broadcast %18 : vector<8x1xf32> to vector<8x8xf32>
    %20 = arith.subf %16, %19 : vector<8x8xf32>
    %21 = math.exp %20 : vector<8x8xf32>
    %cst_12 = arith.constant dense<0.000000e+00> : vector<8xf32>
    %22 = vector.multi_reduction <add>, %21, %cst_12 [1] : vector<8x8xf32> to vector<8xf32>
    %23 = vector.shape_cast %22 : vector<8xf32> to vector<8x1xf32>
    %24 = tpu.reciprocal %23 {approx = true} : vector<8x1xf32> -> vector<8x1xf32>
    %25 = vector.broadcast %24 : vector<8x1xf32> to vector<8x8xf32>
    %26 = arith.mulf %21, %25 : vector<8x8xf32>
    %27 = arith.truncf %26 : vector<8x8xf32> to vector<8x8xbf16>
    %cst_13 = arith.constant dense<0.000000e+00> : vector<8x128xf32>
    %28 = tpu.matmul %27, %15, %cst_13 {dimension_numbers = #tpu.dot_dimension_numbers<[1], [0], [0], [1], [0, 0, 1, 1], [], []>} : vector<8x8xbf16>, vector<8x128xbf16>, vector<8x128xf32> -> vector<8x128xf32>
    %29 = arith.truncf %28 : vector<8x128xf32> to vector<8x128xbf16>
    %30 = vector.extract_strided_slice %7 {offsets = [0, 128], sizes = [8, 128], strides = [1, 1]} : vector<16x768xf32> to vector<8x128xf32>
    %31 = arith.truncf %30 : vector<8x128xf32> to vector<8x128xbf16>
    %32 = vector.extract_strided_slice %7 {offsets = [0, 384], sizes = [8, 128], strides = [1, 1]} : vector<16x768xf32> to vector<8x128xf32>
    %33 = arith.truncf %32 : vector<8x128xf32> to vector<8x128xbf16>
    %34 = vector.extract_strided_slice %7 {offsets = [0, 640], sizes = [8, 128], strides = [1, 1]} : vector<16x768xf32> to vector<8x128xf32>
    %35 = arith.truncf %34 : vector<8x128xf32> to vector<8x128xbf16>
    %cst_14 = arith.constant dense<0.000000e+00> : vector<8x8xf32>
    %36 = tpu.matmul %31, %33, %cst_14 {dimension_numbers = #tpu.dot_dimension_numbers<[1], [1], [0], [0], [0, 0, 1, 0], [], []>} : vector<8x128xbf16>, vector<8x128xbf16>, vector<8x8xf32> -> vector<8x8xf32>
    %cst_15 = arith.constant dense<0xFF800000> : vector<8xf32>
    %37 = vector.multi_reduction <maximumf>, %36, %cst_15 [1] : vector<8x8xf32> to vector<8xf32>
    %38 = vector.shape_cast %37 : vector<8xf32> to vector<8x1xf32>
    %39 = vector.broadcast %38 : vector<8x1xf32> to vector<8x8xf32>
    %40 = arith.subf %36, %39 : vector<8x8xf32>
    %41 = math.exp %40 : vector<8x8xf32>
    %cst_16 = arith.constant dense<0.000000e+00> : vector<8xf32>
    %42 = vector.multi_reduction <add>, %41, %cst_16 [1] : vector<8x8xf32> to vector<8xf32>
    %43 = vector.shape_cast %42 : vector<8xf32> to vector<8x1xf32>
    %44 = tpu.reciprocal %43 {approx = true} : vector<8x1xf32> -> vector<8x1xf32>
    %45 = vector.broadcast %44 : vector<8x1xf32> to vector<8x8xf32>
    %46 = arith.mulf %41, %45 : vector<8x8xf32>
    %47 = arith.truncf %46 : vector<8x8xf32> to vector<8x8xbf16>
    %cst_17 = arith.constant dense<0.000000e+00> : vector<8x128xf32>
    %48 = tpu.matmul %47, %35, %cst_17 {dimension_numbers = #tpu.dot_dimension_numbers<[1], [0], [0], [1], [0, 0, 1, 1], [], []>} : vector<8x8xbf16>, vector<8x128xbf16>, vector<8x128xf32> -> vector<8x128xf32>
    %49 = arith.truncf %48 : vector<8x128xf32> to vector<8x128xbf16>
    %50 = tpu.concatenate %29, %49 in 1 : vector<8x128xbf16>, vector<8x128xbf16> -> vector<8x256xbf16>
    %cst_18 = arith.constant dense<0.000000e+00> : vector<8x256xf32>
    %51 = tpu.matmul %50, %8, %cst_18 {dimension_numbers = #tpu.dot_dimension_numbers<[1], [0], [0], [1], [0, 0, 1, 1], [], []>} : vector<8x256xbf16>, vector<256x256xbf16>, vector<8x256xf32> -> vector<8x256xf32>
    %52 = vector.broadcast %9 : vector<1x256xf32> to vector<8x256xf32>
    %53 = arith.addf %51, %52 : vector<8x256xf32>
    %c0_19 = arith.constant 0 : index
    %c0_20 = arith.constant 0 : index
    %54 = vector.load %arg6[%c0_19, %c0_20] : memref<8x512xf32, #tpu.memory_space<vmem>>, vector<8x256xf32>
    tpu.vector_store %arg6[%c0_19, %c0_20], %53 {strides = array<i32>} : memref<8x512xf32, #tpu.memory_space<vmem>>, vector<8x256xf32>,
    %55 = vector.extract_strided_slice %7 {offsets = [8, 0], sizes = [8, 128], strides = [1, 1]} : vector<16x768xf32> to vector<8x128xf32>
    %56 = arith.truncf %55 : vector<8x128xf32> to vector<8x128xbf16>
    %57 = vector.extract_strided_slice %7 {offsets = [8, 256], sizes = [8, 128], strides = [1, 1]} : vector<16x768xf32> to vector<8x128xf32>
    %58 = arith.truncf %57 : vector<8x128xf32> to vector<8x128xbf16>
    %59 = vector.extract_strided_slice %7 {offsets = [8, 512], sizes = [8, 128], strides = [1, 1]} : vector<16x768xf32> to vector<8x128xf32>
    %60 = arith.truncf %59 : vector<8x128xf32> to vector<8x128xbf16>
    %cst_21 = arith.constant dense<0.000000e+00> : vector<8x8xf32>
    %61 = tpu.matmul %56, %58, %cst_21 {dimension_numbers = #tpu.dot_dimension_numbers<[1], [1], [0], [0], [0, 0, 1, 0], [], []>} : vector<8x128xbf16>, vector<8x128xbf16>, vector<8x8xf32> -> vector<8x8xf32>
    %cst_22 = arith.constant dense<0xFF800000> : vector<8xf32>
    %62 = vector.multi_reduction <maximumf>, %61, %cst_22 [1] : vector<8x8xf32> to vector<8xf32>
    %63 = vector.shape_cast %62 : vector<8xf32> to vector<8x1xf32>
    %64 = vector.broadcast %63 : vector<8x1xf32> to vector<8x8xf32>
    %65 = arith.subf %61, %64 : vector<8x8xf32>
    %66 = math.exp %65 : vector<8x8xf32>
    %cst_23 = arith.constant dense<0.000000e+00> : vector<8xf32>
    %67 = vector.multi_reduction <add>, %66, %cst_23 [1] : vector<8x8xf32> to vector<8xf32>
    %68 = vector.shape_cast %67 : vector<8xf32> to vector<8x1xf32>
    %69 = tpu.reciprocal %68 {approx = true} : vector<8x1xf32> -> vector<8x1xf32>
    %70 = vector.broadcast %69 : vector<8x1xf32> to vector<8x8xf32>
    %71 = arith.mulf %66, %70 : vector<8x8xf32>
    %72 = arith.truncf %71 : vector<8x8xf32> to vector<8x8xbf16>
    %cst_24 = arith.constant dense<0.000000e+00> : vector<8x128xf32>
    %73 = tpu.matmul %72, %60, %cst_24 {dimension_numbers = #tpu.dot_dimension_numbers<[1], [0], [0], [1], [0, 0, 1, 1], [], []>} : vector<8x8xbf16>, vector<8x128xbf16>, vector<8x128xf32> -> vector<8x128xf32>
    %74 = arith.truncf %73 : vector<8x128xf32> to vector<8x128xbf16>
    %75 = vector.extract_strided_slice %7 {offsets = [8, 128], sizes = [8, 128], strides = [1, 1]} : vector<16x768xf32> to vector<8x128xf32>
    %76 = arith.truncf %75 : vector<8x128xf32> to vector<8x128xbf16>
    %77 = vector.extract_strided_slice %7 {offsets = [8, 384], sizes = [8, 128], strides = [1, 1]} : vector<16x768xf32> to vector<8x128xf32>
    %78 = arith.truncf %77 : vector<8x128xf32> to vector<8x128xbf16>
    %79 = vector.extract_strided_slice %7 {offsets = [8, 640], sizes = [8, 128], strides = [1, 1]} : vector<16x768xf32> to vector<8x128xf32>
    %80 = arith.truncf %79 : vector<8x128xf32> to vector<8x128xbf16>
    %cst_25 = arith.constant dense<0.000000e+00> : vector<8x8xf32>
    %81 = tpu.matmul %76, %78, %cst_25 {dimension_numbers = #tpu.dot_dimension_numbers<[1], [1], [0], [0], [0, 0, 1, 0], [], []>} : vector<8x128xbf16>, vector<8x128xbf16>, vector<8x8xf32> -> vector<8x8xf32>
    %cst_26 = arith.constant dense<0xFF800000> : vector<8xf32>
    %82 = vector.multi_reduction <maximumf>, %81, %cst_26 [1] : vector<8x8xf32> to vector<8xf32>
    %83 = vector.shape_cast %82 : vector<8xf32> to vector<8x1xf32>
    %84 = vector.broadcast %83 : vector<8x1xf32> to vector<8x8xf32>
    %85 = arith.subf %81, %84 : vector<8x8xf32>
    %86 = math.exp %85 : vector<8x8xf32>
    %cst_27 = arith.constant dense<0.000000e+00> : vector<8xf32>
    %87 = vector.multi_reduction <add>, %86, %cst_27 [1] : vector<8x8xf32> to vector<8xf32>
    %88 = vector.shape_cast %87 : vector<8xf32> to vector<8x1xf32>
    %89 = tpu.reciprocal %88 {approx = true} : vector<8x1xf32> -> vector<8x1xf32>
    %90 = vector.broadcast %89 : vector<8x1xf32> to vector<8x8xf32>
    %91 = arith.mulf %86, %90 : vector<8x8xf32>
    %92 = arith.truncf %91 : vector<8x8xf32> to vector<8x8xbf16>
    %cst_28 = arith.constant dense<0.000000e+00> : vector<8x128xf32>
    %93 = tpu.matmul %92, %80, %cst_28 {dimension_numbers = #tpu.dot_dimension_numbers<[1], [0], [0], [1], [0, 0, 1, 1], [], []>} : vector<8x8xbf16>, vector<8x128xbf16>, vector<8x128xf32> -> vector<8x128xf32>
    %94 = arith.truncf %93 : vector<8x128xf32> to vector<8x128xbf16>
    %95 = tpu.concatenate %74, %94 in 1 : vector<8x128xbf16>, vector<8x128xbf16> -> vector<8x256xbf16>
    %cst_29 = arith.constant dense<0.000000e+00> : vector<8x256xf32>
    %96 = tpu.matmul %95, %8, %cst_29 {dimension_numbers = #tpu.dot_dimension_numbers<[1], [0], [0], [1], [0, 0, 1, 1], [], []>} : vector<8x256xbf16>, vector<256x256xbf16>, vector<8x256xf32> -> vector<8x256xf32>
    %97 = vector.broadcast %9 : vector<1x256xf32> to vector<8x256xf32>
    %98 = arith.addf %96, %97 : vector<8x256xf32>
    %c0_30 = arith.constant 0 : index
    %c256 = arith.constant 256 : index
    %99 = vector.load %arg6[%c0_30, %c256] : memref<8x512xf32, #tpu.memory_space<vmem>>, vector<8x256xf32>
    tpu.vector_store %arg6[%c0_30, %c256], %98 {strides = array<i32>} : memref<8x512xf32, #tpu.memory_space<vmem>>, vector<8x256xf32>,
    return
  }
  func.func @transform_0(%arg0: i32) -> (i32, i32, i32) {
    %c0_i32 = arith.constant 0 : i32
    %c0_i32_0 = arith.constant 0 : i32
    %c0_i32_1 = arith.constant 0 : i32
    %c0_i32_2 = arith.constant 0 : i32
    return %c0_i32, %c0_i32_0, %c0_i32_1 : i32, i32, i32
  }
  func.func @transform_1(%arg0: i32) -> (i32, i32) {
    %c0_i32 = arith.constant 0 : i32
    %c0_i32_0 = arith.constant 0 : i32
    %c0_i32_1 = arith.constant 0 : i32
    return %c0_i32, %c0_i32_0 : i32, i32
  }
  func.func @transform_2(%arg0: i32) -> (i32, i32) {
    %c0_i32 = arith.constant 0 : i32
    %c0_i32_0 = arith.constant 0 : i32
    %c0_i32_1 = arith.constant 0 : i32
    return %c0_i32, %c0_i32_0 : i32, i32
  }
  func.func @transform_3(%arg0: i32) -> (i32, i32) {
    %c0_i32 = arith.constant 0 : i32
    %c0_i32_0 = arith.constant 0 : i32
    %c0_i32_1 = arith.constant 0 : i32
    return %c0_i32, %c0_i32_0 : i32, i32
  }
  func.func @transform_4(%arg0: i32) -> (i32, i32) {
    %c0_i32 = arith.constant 0 : i32
    %c0_i32_0 = arith.constant 0 : i32
    %c0_i32_1 = arith.constant 0 : i32
    return %c0_i32, %c0_i32_0 : i32, i32
  }
  func.func @transform_5(%arg0: i32) -> (i32, i32) {
    %c0_i32 = arith.constant 0 : i32
    %c0_i32_0 = arith.constant 0 : i32
    %c0_i32_1 = arith.constant 0 : i32
    return %c0_i32, %c0_i32_0 : i32, i32
  }
}

</mosaic_0001>

<llo_original>
// kernel: tpu_custom_call.1
$region0: #{tpu_custom_call.1}
  #allocation0 [shape = 'u32[]', space=smem, size = 0x4, offset = 0x4, fixed_abs, tag = 'smem constant byte address 0x4 - core index']
  #allocation1 [shape = 'u32[144,128]{1,0:T(1,128)}', space=vmem, size = 0x12000, scoped, tag = 'internal scratch']
  %s0 = inlined_call_operand.hbm [shape: f32[2,8,256], index: 0, kind: input, shape index: {}]
  %s1 = inlined_call_operand.hbm [shape: bf16[256,768], index: 1, kind: input, shape index: {}]
  %s2 = inlined_call_operand.vmem [shape: f32[1,768], index: 2, kind: input, shape index: {}]
  %s3 = inlined_call_operand.hbm [shape: bf16[256,256], index: 3, kind: input, shape index: {}]
  %s4 = inlined_call_operand.vmem [shape: f32[1,256], index: 4, kind: input, shape index: {}]
  %s5 = inlined_call_operand.hbm [shape: f32[8,512], index: 5, kind: output, shape index: {}]
  %s6 = sld [smem:[#allocation0]]
  $region42: #{tpu_custom_call.1} parent=0
    _
  %s8 = ssub.s32 1, %s6
  %s9 = scalar_select 0, %s8, %s6
  $region1: #{tpu_custom_call.1} parent=0
    #allocation2 [shape = 'u8[16384]{0}', space=vmem, size = 0x4000, scoped, tag = 'input window, operand 0, single buffered']
    #allocation3 [shape = 's32[1]{0}', space=sflag, size = 0x4, scoped, tag = 'scoped memory for tpu_custom_call.1']
    #allocation4 [shape = 's32[1]{0}', space=sflag, size = 0x4, scoped, tag = 'scoped memory for tpu_custom_call.1']
    #allocation5 [shape = 'u8[393216]{0}', space=vmem, size = 0x60000, scoped, tag = 'input window, operand 1, single buffered']
    #allocation6 [shape = 's32[1]{0}', space=sflag, size = 0x4, scoped, tag = 'scoped memory for tpu_custom_call.1']
    #allocation7 [shape = 'u8[131072]{0}', space=vmem, size = 0x20000, scoped, tag = 'input window, operand 3, single buffered']
    #allocation8 [shape = 'u8[16384]{0}', space=vmem, size = 0x4000, scoped, tag = 'output window, operand 0, single buffered']
    %10 = vsyncpa [#allocation3], 0
    %11 = vsyncpa [#allocation6], 0
    %12 = vsyncpa [#allocation4], 0
    // Predicated region
    $region2: #{tpu_custom_call.1} parent=1 // pred_check
      _
    $region3: #{tpu_custom_call.1} parent=1 // pred_check_branch
      %14 = sbr.rel (0) target = $region5
    $region4: #{tpu_custom_call.1} parent=1 // pred_region
      %s16 = ssub.s32 512, 512
      %17 = vsyncadd [#allocation3], %s16
      %s18 = sshll.u32 [#allocation2], 4
      %s19 = int_to_ptr.vmem [resolvable:$true] %s18
      %24 = dma.hbm_to_vmem [thread:$0]  %s0, 512, %s19, [#allocation3], 256, 256, 16
    $region5: #{tpu_custom_call.1} parent=1 // pred_fallthru
      _
    // Predicated region
    $region6: #{tpu_custom_call.1} parent=1 // pred_check
      _
    $region7: #{tpu_custom_call.1} parent=1 // pred_check_branch
      %26 = sbr.rel (0) target = $region9
    $region8: #{tpu_custom_call.1} parent=1 // pred_region
      %s28 = ssub.s32 12288, 12288
      %29 = vsyncadd [#allocation6], %s28
      %s30 = sshll.u32 [#allocation5], 4
      %s31 = int_to_ptr.vmem [resolvable:$true] %s30
      %36 = dma.hbm_to_vmem [thread:$0]  %s1, 12288, %s31, [#allocation6], 384, 384, 24
    $region9: #{tpu_custom_call.1} parent=1 // pred_fallthru
      _
    // Predicated region
    $region10: #{tpu_custom_call.1} parent=1 // pred_check
      _
    $region11: #{tpu_custom_call.1} parent=1 // pred_check_branch
      %38 = sbr.rel (0) target = $region13
    $region12: #{tpu_custom_call.1} parent=1 // pred_region
      _
    $region13: #{tpu_custom_call.1} parent=1 // pred_fallthru
      _
    // Predicated region
    $region14: #{tpu_custom_call.1} parent=1 // pred_check
      _
    $region15: #{tpu_custom_call.1} parent=1 // pred_check_branch
      %40 = sbr.rel (0) target = $region17
    $region16: #{tpu_custom_call.1} parent=1 // pred_region
      %s42 = ssub.s32 4096, 4096
      %43 = vsyncadd [#allocation6], %s42
      %s44 = sshll.u32 [#allocation7], 4
      %s45 = int_to_ptr.vmem [resolvable:$true] %s44
      %50 = dma.hbm_to_vmem [thread:$0]  %s3, 4096, %s45, [#allocation6], 128, 128, 8
    $region17: #{tpu_custom_call.1} parent=1 // pred_fallthru
      _
    // Predicated region
    $region18: #{tpu_custom_call.1} parent=1 // pred_check
      _
    $region19: #{tpu_custom_call.1} parent=1 // pred_check_branch
      %52 = sbr.rel (0) target = $region21
    $region20: #{tpu_custom_call.1} parent=1 // pred_region
      _
    $region21: #{tpu_custom_call.1} parent=1 // pred_fallthru
      _
    // Predicated region
    $region22: #{tpu_custom_call.1} parent=1 // pred_check
      _
    $region23: #{tpu_custom_call.1} parent=1 // pred_check_branch
      %54 = sbr.rel (0) target = $region25
    $region24: #{tpu_custom_call.1} parent=1 // pred_region
      %55 = dma.done [#allocation3], 512
    $region25: #{tpu_custom_call.1} parent=1 // pred_fallthru
      _
    // Predicated region
    $region26: #{tpu_custom_call.1} parent=1 // pred_check
      _
    $region27: #{tpu_custom_call.1} parent=1 // pred_check_branch
      %57 = sbr.rel (0) target = $region29
    $region28: #{tpu_custom_call.1} parent=1 // pred_region
      %58 = dma.done [#allocation6], 12288
    $region29: #{tpu_custom_call.1} parent=1 // pred_fallthru
      _
    // Predicated region
    $region30: #{tpu_custom_call.1} parent=1 // pred_check
      _
    $region31: #{tpu_custom_call.1} parent=1 // pred_check_branch
      %60 = sbr.rel (0) target = $region33
    $region32: #{tpu_custom_call.1} parent=1 // pred_region
      %61 = dma.done [#allocation6], 4096
    $region33: #{tpu_custom_call.1} parent=1 // pred_fallthru
      _
    %v63 = vld [vmem:[#allocation2] sm:$0xff]
    %v64 = vld [vmem:[#allocation2 + $0x8] sm:$0xff]
    %v65 = vld [vmem:[#allocation2 + $0x10] sm:$0xff]
    %v66 = vld [vmem:[#allocation2 + $0x18] sm:$0xff]
    %v67 = vpack.c.bf16 %v65, %v63
    %v68 = vpack.c.bf16 %v66, %v64
    %v69 = vld [vmem:[#allocation5] sm:$0xff]
    %v70 = vld [vmem:[#allocation5 + $0x8] sm:$0xff]
    %v71 = vld [vmem:[#allocation5 + $0x10] sm:$0xff]
    %v72 = vld [vmem:[#allocation5 + $0x18] sm:$0xff]
    %v73 = vld [vmem:[#allocation5 + $0x20] sm:$0xff]
    %v74 = vld [vmem:[#allocation5 + $0x28] sm:$0xff]
    %v75 = vld [vmem:[#allocation5 + $0x30] sm:$0xff]
    %v76 = vld [vmem:[#allocation5 + $0x38] sm:$0xff]
    %v77 = vld [vmem:[#allocation5 + $0x40] sm:$0xff]
    %v78 = vld [vmem:[#allocation5 + $0x48] sm:$0xff]
    %v79 = vld [vmem:[#allocation5 + $0x50] sm:$0xff]
    %v80 = vld [vmem:[#allocation5 + $0x58] sm:$0xff]
    %v81 = vld [vmem:[#allocation5 + $0x60] sm:$0xff]
    %v82 = vld [vmem:[#allocation5 + $0x68] sm:$0xff]
    %v83 = vld [vmem:[#allocation5 + $0x70] sm:$0xff]
    %v84 = vld [vmem:[#allocation5 + $0x78] sm:$0xff]
    %v85 = vld [vmem:[#allocation5 + $0x80] sm:$0xff]
    %v86 = vld [vmem:[#allocation5 + $0x88] sm:$0xff]
    %v87 = vld [vmem:[#allocation5 + $0x90] sm:$0xff]
    %v88 = vld [vmem:[#allocation5 + $0x98] sm:$0xff]
    %v89 = vld [vmem:[#allocation5 + $0xa0] sm:$0xff]
    %v90 = vld [vmem:[#allocation5 + $0xa8] sm:$0xff]
    %v91 = vld [vmem:[#allocation5 + $0xb0] sm:$0xff]
    %v92 = vld [vmem:[#allocation5 + $0xb8] sm:$0xff]
    %v93 = vld [vmem:[#allocation5 + $0xc0] sm:$0xff]
    %v94 = vld [vmem:[#allocation5 + $0xc8] sm:$0xff]
    %v95 = vld [vmem:[#allocation5 + $0xd0] sm:$0xff]
    %v96 = vld [vmem:[#allocation5 + $0xd8] sm:$0xff]
    %v97 = vld [vmem:[#allocation5 + $0xe0] sm:$0xff]
    %v98 = vld [vmem:[#allocation5 + $0xe8] sm:$0xff]
    %v99 = vld [vmem:[#allocation5 + $0xf0] sm:$0xff]
    %v100 = vld [vmem:[#allocation5 + $0xf8] sm:$0xff]
    %v101 = vld [vmem:[#allocation5 + $0x100] sm:$0xff]
    %v102 = vld [vmem:[#allocation5 + $0x108] sm:$0xff]
    %v103 = vld [vmem:[#allocation5 + $0x110] sm:$0xff]
    %v104 = vld [vmem:[#allocation5 + $0x118] sm:$0xff]
    %v105 = vld [vmem:[#allocation5 + $0x120] sm:$0xff]
    %v106 = vld [vmem:[#allocation5 + $0x128] sm:$0xff]
    %v107 = vld [vmem:[#allocation5 + $0x130] sm:$0xff]
    %v108 = vld [vmem:[#allocation5 + $0x138] sm:$0xff]
    %v109 = vld [vmem:[#allocation5 + $0x140] sm:$0xff]
    %v110 = vld [vmem:[#allocation5 + $0x148] sm:$0xff]
    %v111 = vld [vmem:[#allocation5 + $0x150] sm:$0xff]
    %v112 = vld [vmem:[#allocation5 + $0x158] sm:$0xff]
    %v113 = vld [vmem:[#allocation5 + $0x160] sm:$0xff]
    %v114 = vld [vmem:[#allocation5 + $0x168] sm:$0xff]
    %v115 = vld [vmem:[#allocation5 + $0x170] sm:$0xff]
    %v116 = vld [vmem:[#allocation5 + $0x178] sm:$0xff]
    %v117 = vld [vmem:[#allocation5 + $0x180] sm:$0xff]
    %v118 = vld [vmem:[#allocation5 + $0x188] sm:$0xff]
    %v119 = vld [vmem:[#allocation5 + $0x190] sm:$0xff]
    %v120 = vld [vmem:[#allocation5 + $0x198] sm:$0xff]
    %v121 = vld [vmem:[#allocation5 + $0x1a0] sm:$0xff]
    %v122 = vld [vmem:[#allocation5 + $0x1a8] sm:$0xff]
    %v123 = vld [vmem:[#allocation5 + $0x1b0] sm:$0xff]
    %v124 = vld [vmem:[#allocation5 + $0x1b8] sm:$0xff]
    %v125 = vld [vmem:[#allocation5 + $0x1c0] sm:$0xff]
    %v126 = vld [vmem:[#allocation5 + $0x1c8] sm:$0xff]
    %v127 = vld [vmem:[#allocation5 + $0x1d0] sm:$0xff]
    %v128 = vld [vmem:[#allocation5 + $0x1d8] sm:$0xff]
    %v129 = vld [vmem:[#allocation5 + $0x1e0] sm:$0xff]
    %v130 = vld [vmem:[#allocation5 + $0x1e8] sm:$0xff]
    %v131 = vld [vmem:[#allocation5 + $0x1f0] sm:$0xff]
    %v132 = vld [vmem:[#allocation5 + $0x1f8] sm:$0xff]
    %v133 = vld [vmem:[#allocation5 + $0x200] sm:$0xff]
    %v134 = vld [vmem:[#allocation5 + $0x208] sm:$0xff]
    %v135 = vld [vmem:[#allocation5 + $0x210] sm:$0xff]
    %v136 = vld [vmem:[#allocation5 + $0x218] sm:$0xff]
    %v137 = vld [vmem:[#allocation5 + $0x220] sm:$0xff]
    %v138 = vld [vmem:[#allocation5 + $0x228] sm:$0xff]
    %v139 = vld [vmem:[#allocation5 + $0x230] sm:$0xff]
    %v140 = vld [vmem:[#allocation5 + $0x238] sm:$0xff]
    %v141 = vld [vmem:[#allocation5 + $0x240] sm:$0xff]
    %v142 = vld [vmem:[#allocation5 + $0x248] sm:$0xff]
    %v143 = vld [vmem:[#allocation5 + $0x250] sm:$0xff]
    %v144 = vld [vmem:[#allocation5 + $0x258] sm:$0xff]
    %v145 = vld [vmem:[#allocation5 + $0x260] sm:$0xff]
    %v146 = vld [vmem:[#allocation5 + $0x268] sm:$0xff]
    %v147 = vld [vmem:[#allocation5 + $0x270] sm:$0xff]
    %v148 = vld [vmem:[#allocation5 + $0x278] sm:$0xff]
    %v149 = vld [vmem:[#allocation5 + $0x280] sm:$0xff]
    %v150 = vld [vmem:[#allocation5 + $0x288] sm:$0xff]
    %v151 = vld [vmem:[#allocation5 + $0x290] sm:$0xff]
    %v152 = vld [vmem:[#allocation5 + $0x298] sm:$0xff]
    %v153 = vld [vmem:[#allocation5 + $0x2a0] sm:$0xff]
    %v154 = vld [vmem:[#allocation5 + $0x2a8] sm:$0xff]
    %v155 = vld [vmem:[#allocation5 + $0x2b0] sm:$0xff]
    %v156 = vld [vmem:[#allocation5 + $0x2b8] sm:$0xff]
    %v157 = vld [vmem:[#allocation5 + $0x2c0] sm:$0xff]
    %v158 = vld [vmem:[#allocation5 + $0x2c8] sm:$0xff]
    %v159 = vld [vmem:[#allocation5 + $0x2d0] sm:$0xff]
    %v160 = vld [vmem:[#allocation5 + $0x2d8] sm:$0xff]
    %v161 = vld [vmem:[#allocation5 + $0x2e0] sm:$0xff]
    %v162 = vld [vmem:[#allocation5 + $0x2e8] sm:$0xff]
    %v163 = vld [vmem:[#allocation5 + $0x2f0] sm:$0xff]
    %v164 = vld [vmem:[#allocation5 + $0x2f8] sm:$0xff]
    %v165 = vld [vmem:[%s2] sm:$0x3f]
    %v167 = vlaneseq
    %v168 = vshrl.u32 %v167, 7
    %v169 = vsub.s32 0, %v168
    %v170 = vrot.slane %v165, %v169
    %v171 = vlaneseq
    %v172 = vshrl.u32 %v171, 7
    %v173 = vsub.s32 1, %v172
    %v174 = vrot.slane %v165, %v173
    %v175 = vlaneseq
    %v176 = vshrl.u32 %v175, 7
    %v177 = vsub.s32 2, %v176
    %v178 = vrot.slane %v165, %v177
    %v179 = vlaneseq
    %v180 = vshrl.u32 %v179, 7
    %v181 = vsub.s32 3, %v180
    %v182 = vrot.slane %v165, %v181
    %v183 = vlaneseq
    %v184 = vshrl.u32 %v183, 7
    %v185 = vsub.s32 4, %v184
    %v186 = vrot.slane %v165, %v185
    %v187 = vlaneseq
    %v188 = vshrl.u32 %v187, 7
    %v189 = vsub.s32 5, %v188
    %v190 = vrot.slane %v165, %v189
    %v293 = vunpack.c.l.b16 %v69
    %v294 = vunpack.c.h.b16 %v69
    %v295 = vunpack.c.l.b16 %v70
    %v296 = vunpack.c.h.b16 %v70
    %v297 = vunpack.c.l.b16 %v71
    %v298 = vunpack.c.h.b16 %v71
    %v299 = vunpack.c.l.b16 %v72
    %v300 = vunpack.c.h.b16 %v72
    %v301 = vunpack.c.l.b16 %v73
    %v302 = vunpack.c.h.b16 %v73
    %v303 = vunpack.c.l.b16 %v74
    %v304 = vunpack.c.h.b16 %v74
    %v305 = vunpack.c.l.b16 %v75
    %v306 = vunpack.c.h.b16 %v75
    %v307 = vunpack.c.l.b16 %v76
    %v308 = vunpack.c.h.b16 %v76
    %v309 = vunpack.c.l.b16 %v77
    %v310 = vunpack.c.h.b16 %v77
    %v311 = vunpack.c.l.b16 %v78
    %v312 = vunpack.c.h.b16 %v78
    %v313 = vunpack.c.l.b16 %v79
    %v314 = vunpack.c.h.b16 %v79
    %v315 = vunpack.c.l.b16 %v80
    %v316 = vunpack.c.h.b16 %v80
    %v317 = vunpack.c.l.b16 %v81
    %v318 = vunpack.c.h.b16 %v81
    %v319 = vunpack.c.l.b16 %v82
    %v320 = vunpack.c.h.b16 %v82
    %v321 = vunpack.c.l.b16 %v83
    %v322 = vunpack.c.h.b16 %v83
    %v323 = vunpack.c.l.b16 %v84
    %v324 = vunpack.c.h.b16 %v84
    %v325 = vunpack.c.l.b16 %v85
    %v326 = vunpack.c.h.b16 %v85
    %v327 = vunpack.c.l.b16 %v86
    %v328 = vunpack.c.h.b16 %v86
    %v329 = vunpack.c.l.b16 %v87
    %v330 = vunpack.c.h.b16 %v87
    %v331 = vunpack.c.l.b16 %v88
    %v332 = vunpack.c.h.b16 %v88
    %v333 = vunpack.c.l.b16 %v89
    %v334 = vunpack.c.h.b16 %v89
    %v335 = vunpack.c.l.b16 %v90
    %v336 = vunpack.c.h.b16 %v90
    %v337 = vunpack.c.l.b16 %v91
    %v338 = vunpack.c.h.b16 %v91
    %v339 = vunpack.c.l.b16 %v92
    %v340 = vunpack.c.h.b16 %v92
    %v341 = vunpack.c.l.b16 %v93
    %v342 = vunpack.c.h.b16 %v93
    %v343 = vunpack.c.l.b16 %v94
    %v344 = vunpack.c.h.b16 %v94
    %v345 = vunpack.c.l.b16 %v95
    %v346 = vunpack.c.h.b16 %v95
    %v347 = vunpack.c.l.b16 %v96
    %v348 = vunpack.c.h.b16 %v96
    %v349 = vunpack.c.l.b16 %v97
    %v350 = vunpack.c.h.b16 %v97
    %v351 = vunpack.c.l.b16 %v98
    %v352 = vunpack.c.h.b16 %v98
    %v353 = vunpack.c.l.b16 %v99
    %v354 = vunpack.c.h.b16 %v99
    %v355 = vunpack.c.l.b16 %v100
    %v356 = vunpack.c.h.b16 %v100
    %v357 = vunpack.c.l.b16 %v101
    %v358 = vunpack.c.h.b16 %v101
    %v359 = vunpack.c.l.b16 %v102
    %v360 = vunpack.c.h.b16 %v102
    %v361 = vunpack.c.l.b16 %v103
    %v362 = vunpack.c.h.b16 %v103
    %v363 = vunpack.c.l.b16 %v104
    %v364 = vunpack.c.h.b16 %v104
    %v365 = vunpack.c.l.b16 %v105
    %v366 = vunpack.c.h.b16 %v105
    %v367 = vunpack.c.l.b16 %v106
    %v368 = vunpack.c.h.b16 %v106
    %v369 = vunpack.c.l.b16 %v107
    %v370 = vunpack.c.h.b16 %v107
    %v371 = vunpack.c.l.b16 %v108
    %v372 = vunpack.c.h.b16 %v108
    %v373 = vunpack.c.l.b16 %v109
    %v374 = vunpack.c.h.b16 %v109
    %v375 = vunpack.c.l.b16 %v110
    %v376 = vunpack.c.h.b16 %v110
    %v377 = vunpack.c.l.b16 %v111
    %v378 = vunpack.c.h.b16 %v111
    %v379 = vunpack.c.l.b16 %v112
    %v380 = vunpack.c.h.b16 %v112
    %v381 = vunpack.c.l.b16 %v113
    %v382 = vunpack.c.h.b16 %v113
    %v383 = vunpack.c.l.b16 %v114
    %v384 = vunpack.c.h.b16 %v114
    %v385 = vunpack.c.l.b16 %v115
    %v386 = vunpack.c.h.b16 %v115
    %v387 = vunpack.c.l.b16 %v116
    %v388 = vunpack.c.h.b16 %v116
    %v389 = vunpack.c.l.b16 %v117
    %v390 = vunpack.c.h.b16 %v117
    %v391 = vunpack.c.l.b16 %v118
    %v392 = vunpack.c.h.b16 %v118
    %v393 = vunpack.c.l.b16 %v119
    %v394 = vunpack.c.h.b16 %v119
    %v395 = vunpack.c.l.b16 %v120
    %v396 = vunpack.c.h.b16 %v120
    %v397 = vunpack.c.l.b16 %v121
    %v398 = vunpack.c.h.b16 %v121
    %v399 = vunpack.c.l.b16 %v122
    %v400 = vunpack.c.h.b16 %v122
    %v401 = vunpack.c.l.b16 %v123
    %v402 = vunpack.c.h.b16 %v123
    %v403 = vunpack.c.l.b16 %v124
    %v404 = vunpack.c.h.b16 %v124
    %v405 = vunpack.c.l.b16 %v125
    %v406 = vunpack.c.h.b16 %v125
    %v407 = vunpack.c.l.b16 %v126
    %v408 = vunpack.c.h.b16 %v126
    %v409 = vunpack.c.l.b16 %v127
    %v410 = vunpack.c.h.b16 %v127
    %v411 = vunpack.c.l.b16 %v128
    %v412 = vunpack.c.h.b16 %v128
    %v413 = vunpack.c.l.b16 %v129
    %v414 = vunpack.c.h.b16 %v129
    %v415 = vunpack.c.l.b16 %v130
    %v416 = vunpack.c.h.b16 %v130
    %v417 = vunpack.c.l.b16 %v131
    %v418 = vunpack.c.h.b16 %v131
    %v419 = vunpack.c.l.b16 %v132
    %v420 = vunpack.c.h.b16 %v132
    %v421 = vunpack.c.l.b16 %v133
    %v422 = vunpack.c.h.b16 %v133
    %v423 = vunpack.c.l.b16 %v134
    %v424 = vunpack.c.h.b16 %v134
    %v425 = vunpack.c.l.b16 %v135
    %v426 = vunpack.c.h.b16 %v135
    %v427 = vunpack.c.l.b16 %v136
    %v428 = vunpack.c.h.b16 %v136
    %v429 = vunpack.c.l.b16 %v137
    %v430 = vunpack.c.h.b16 %v137
    %v431 = vunpack.c.l.b16 %v138
    %v432 = vunpack.c.h.b16 %v138
    %v433 = vunpack.c.l.b16 %v139
    %v434 = vunpack.c.h.b16 %v139
    %v435 = vunpack.c.l.b16 %v140
    %v436 = vunpack.c.h.b16 %v140
    %v437 = vunpack.c.l.b16 %v141
    %v438 = vunpack.c.h.b16 %v141
    %v439 = vunpack.c.l.b16 %v142
    %v440 = vunpack.c.h.b16 %v142
    %v441 = vunpack.c.l.b16 %v143
    %v442 = vunpack.c.h.b16 %v143
    %v443 = vunpack.c.l.b16 %v144
    %v444 = vunpack.c.h.b16 %v144
    %v445 = vunpack.c.l.b16 %v145
    %v446 = vunpack.c.h.b16 %v145
    %v447 = vunpack.c.l.b16 %v146
    %v448 = vunpack.c.h.b16 %v146
    %v449 = vunpack.c.l.b16 %v147
    %v450 = vunpack.c.h.b16 %v147
    %v451 = vunpack.c.l.b16 %v148
    %v452 = vunpack.c.h.b16 %v148
    %v453 = vunpack.c.l.b16 %v149
    %v454 = vunpack.c.h.b16 %v149
    %v455 = vunpack.c.l.b16 %v150
    %v456 = vunpack.c.h.b16 %v150
    %v457 = vunpack.c.l.b16 %v151
    %v458 = vunpack.c.h.b16 %v151
    %v459 = vunpack.c.l.b16 %v152
    %v460 = vunpack.c.h.b16 %v152
    %v461 = vunpack.c.l.b16 %v153
    %v462 = vunpack.c.h.b16 %v153
    %v463 = vunpack.c.l.b16 %v154
    %v464 = vunpack.c.h.b16 %v154
    %v465 = vunpack.c.l.b16 %v155
    %v466 = vunpack.c.h.b16 %v155
    %v467 = vunpack.c.l.b16 %v156
    %v468 = vunpack.c.h.b16 %v156
    %v469 = vunpack.c.l.b16 %v157
    %v470 = vunpack.c.h.b16 %v157
    %v471 = vunpack.c.l.b16 %v158
    %v472 = vunpack.c.h.b16 %v158
    %v473 = vunpack.c.l.b16 %v159
    %v474 = vunpack.c.h.b16 %v159
    %v475 = vunpack.c.l.b16 %v160
    %v476 = vunpack.c.h.b16 %v160
    %v477 = vunpack.c.l.b16 %v161
    %v478 = vunpack.c.h.b16 %v161
    %v479 = vunpack.c.l.b16 %v162
    %v480 = vunpack.c.h.b16 %v162
    %v481 = vunpack.c.l.b16 %v163
    %v482 = vunpack.c.h.b16 %v163
    %v483 = vunpack.c.l.b16 %v164
    %v484 = vunpack.c.h.b16 %v164
    %v485 = vpack.c.b16 %v299, %v293
    %v486 = vpack.c.b16 %v300, %v294
    %v487 = vpack.c.b16 %v301, %v295
    %v488 = vpack.c.b16 %v302, %v296
    %v489 = vpack.c.b16 %v303, %v297
    %v490 = vpack.c.b16 %v304, %v298
    %v491 = vpack.c.b16 %v311, %v305
    %v492 = vpack.c.b16 %v312, %v306
    %v493 = vpack.c.b16 %v313, %v307
    %v494 = vpack.c.b16 %v314, %v308
    %v495 = vpack.c.b16 %v315, %v309
    %v496 = vpack.c.b16 %v316, %v310
    %v497 = vpack.c.b16 %v323, %v317
    %v498 = vpack.c.b16 %v324, %v318
    %v499 = vpack.c.b16 %v325, %v319
    %v500 = vpack.c.b16 %v326, %v320
    %v501 = vpack.c.b16 %v327, %v321
    %v502 = vpack.c.b16 %v328, %v322
    %v503 = vpack.c.b16 %v335, %v329
    %v504 = vpack.c.b16 %v336, %v330
    %v505 = vpack.c.b16 %v337, %v331
    %v506 = vpack.c.b16 %v338, %v332
    %v507 = vpack.c.b16 %v339, %v333
    %v508 = vpack.c.b16 %v340, %v334
    %v509 = vpack.c.b16 %v347, %v341
    %v510 = vpack.c.b16 %v348, %v342
    %v511 = vpack.c.b16 %v349, %v343
    %v512 = vpack.c.b16 %v350, %v344
    %v513 = vpack.c.b16 %v351, %v345
    %v514 = vpack.c.b16 %v352, %v346
    %v515 = vpack.c.b16 %v359, %v353
    %v516 = vpack.c.b16 %v360, %v354
    %v517 = vpack.c.b16 %v361, %v355
    %v518 = vpack.c.b16 %v362, %v356
    %v519 = vpack.c.b16 %v363, %v357
    %v520 = vpack.c.b16 %v364, %v358
    %v521 = vpack.c.b16 %v371, %v365
    %v522 = vpack.c.b16 %v372, %v366
    %v523 = vpack.c.b16 %v373, %v367
    %v524 = vpack.c.b16 %v374, %v368
    %v525 = vpack.c.b16 %v375, %v369
    %v526 = vpack.c.b16 %v376, %v370
    %v527 = vpack.c.b16 %v383, %v377
    %v528 = vpack.c.b16 %v384, %v378
    %v529 = vpack.c.b16 %v385, %v379
    %v530 = vpack.c.b16 %v386, %v380
    %v531 = vpack.c.b16 %v387, %v381
    %v532 = vpack.c.b16 %v388, %v382
    %v533 = vpack.c.b16 %v395, %v389
    %v534 = vpack.c.b16 %v396, %v390
    %v535 = vpack.c.b16 %v397, %v391
    %v536 = vpack.c.b16 %v398, %v392
    %v537 = vpack.c.b16 %v399, %v393
    %v538 = vpack.c.b16 %v400, %v394
    %v539 = vpack.c.b16 %v407, %v401
    %v540 = vpack.c.b16 %v408, %v402
    %v541 = vpack.c.b16 %v409, %v403
    %v542 = vpack.c.b16 %v410, %v404
    %v543 = vpack.c.b16 %v411, %v405
    %v544 = vpack.c.b16 %v412, %v406
    %v545 = vpack.c.b16 %v419, %v413
    %v546 = vpack.c.b16 %v420, %v414
    %v547 = vpack.c.b16 %v421, %v415
    %v548 = vpack.c.b16 %v422, %v416
    %v549 = vpack.c.b16 %v423, %v417
    %v550 = vpack.c.b16 %v424, %v418
    %v551 = vpack.c.b16 %v431, %v425
    %v552 = vpack.c.b16 %v432, %v426
    %v553 = vpack.c.b16 %v433, %v427
    %v554 = vpack.c.b16 %v434, %v428
    %v555 = vpack.c.b16 %v435, %v429
    %v556 = vpack.c.b16 %v436, %v430
    %v557 = vpack.c.b16 %v443, %v437
    %v558 = vpack.c.b16 %v444, %v438
    %v559 = vpack.c.b16 %v445, %v439
    %v560 = vpack.c.b16 %v446, %v440
    %v561 = vpack.c.b16 %v447, %v441
    %v562 = vpack.c.b16 %v448, %v442
    %v563 = vpack.c.b16 %v455, %v449
    %v564 = vpack.c.b16 %v456, %v450
    %v565 = vpack.c.b16 %v457, %v451
    %v566 = vpack.c.b16 %v458, %v452
    %v567 = vpack.c.b16 %v459, %v453
    %v568 = vpack.c.b16 %v460, %v454
    %v569 = vpack.c.b16 %v467, %v461
    %v570 = vpack.c.b16 %v468, %v462
    %v571 = vpack.c.b16 %v469, %v463
    %v572 = vpack.c.b16 %v470, %v464
    %v573 = vpack.c.b16 %v471, %v465
    %v574 = vpack.c.b16 %v472, %v466
    %v575 = vpack.c.b16 %v479, %v473
    %v576 = vpack.c.b16 %v480, %v474
    %v577 = vpack.c.b16 %v481, %v475
    %v578 = vpack.c.b16 %v482, %v476
    %v579 = vpack.c.b16 %v483, %v477
    %v580 = vpack.c.b16 %v484, %v478
    %677 = vmatprep.subr.bf16.mxu0 %v486
    %678 = vmatpush1.bf16.msra.mxu0 %v485
    %679 = vmatprep.subr.bf16.mxu0 %v492
    %680 = vmatpush1.bf16.msra.mxu0 %v491
    %681 = vmatprep.subr.bf16.mxu0 %v498
    %682 = vmatpush1.bf16.msra.mxu0 %v497
    %683 = vmatprep.subr.bf16.mxu0 %v504
    %684 = vmatpush1.bf16.msra.mxu0 %v503
    %685 = vmatprep.subr.bf16.mxu0 %v510
    %686 = vmatpush1.bf16.msra.mxu0 %v509
    %687 = vmatprep.subr.bf16.mxu0 %v516
    %688 = vmatpush1.bf16.msra.mxu0 %v515
    %689 = vmatprep.subr.bf16.mxu0 %v522
    %690 = vmatpush1.bf16.msra.mxu0 %v521
    %691 = vmatprep.subr.bf16.mxu0 %v528
    %692 = vmatpush1.bf16.msra.mxu0 %v527
    %693 = vmatprep.subr.bf16.mxu0 %v534
    %694 = vmatpush1.bf16.msra.mxu0 %v533
    %695 = vmatprep.subr.bf16.mxu0 %v540
    %696 = vmatpush1.bf16.msra.mxu0 %v539
    %697 = vmatprep.subr.bf16.mxu0 %v546
    %698 = vmatpush1.bf16.msra.mxu0 %v545
    %699 = vmatprep.subr.bf16.mxu0 %v552
    %700 = vmatpush1.bf16.msra.mxu0 %v551
    %701 = vmatprep.subr.bf16.mxu0 %v558
    %702 = vmatpush1.bf16.msra.mxu0 %v557
    %703 = vmatprep.subr.bf16.mxu0 %v564
    %704 = vmatpush1.bf16.msra.mxu0 %v563
    %705 = vmatprep.subr.bf16.mxu0 %v570
    %706 = vmatpush1.bf16.msra.mxu0 %v569
    %707 = vmatprep.subr.bf16.mxu0 %v576
    %708 = vmatpush1.bf16.msra.mxu0 %v575
    %709 = vmatprep.mubr.bf16.mxu0 %v68
    %710 = vmatmul.mubr.bf16.gmra.mrb[0].mxu0 %v67
    %v711 = vpop.f32.mrb[0].mxu0
    %v712 = vadd.f32 %v170, %v711
    %v713 = vpop.f32.mrb[0].mxu0
    %v714 = vadd.f32 %v174, %v713
    %v715 = vpop.f32.mrb[0].mxu0
    %v716 = vadd.f32 %v170, %v715
    %v717 = vpop.f32.mrb[0].mxu0
    %v718 = vadd.f32 %v174, %v717
    %719 = vdwg.mxu0
    %720 = vmatprep.subr.bf16.mxu0 %v488
    %721 = vmatpush1.bf16.msra.mxu0 %v487
    %722 = vmatprep.subr.bf16.mxu0 %v494
    %723 = vmatpush1.bf16.msra.mxu0 %v493
    %724 = vmatprep.subr.bf16.mxu0 %v500
    %725 = vmatpush1.bf16.msra.mxu0 %v499
    %726 = vmatprep.subr.bf16.mxu0 %v506
    %727 = vmatpush1.bf16.msra.mxu0 %v505
    %728 = vmatprep.subr.bf16.mxu0 %v512
    %729 = vmatpush1.bf16.msra.mxu0 %v511
    %730 = vmatprep.subr.bf16.mxu0 %v518
    %731 = vmatpush1.bf16.msra.mxu0 %v517
    %732 = vmatprep.subr.bf16.mxu0 %v524
    %733 = vmatpush1.bf16.msra.mxu0 %v523
    %734 = vmatprep.subr.bf16.mxu0 %v530
    %735 = vmatpush1.bf16.msra.mxu0 %v529
    %736 = vmatprep.subr.bf16.mxu0 %v536
    %737 = vmatpush1.bf16.msra.mxu0 %v535
    %738 = vmatprep.subr.bf16.mxu0 %v542
    %739 = vmatpush1.bf16.msra.mxu0 %v541
    %740 = vmatprep.subr.bf16.mxu0 %v548
    %741 = vmatpush1.bf16.msra.mxu0 %v547
    %742 = vmatprep.subr.bf16.mxu0 %v554
    %743 = vmatpush1.bf16.msra.mxu0 %v553
    %744 = vmatprep.subr.bf16.mxu0 %v560
    %745 = vmatpush1.bf16.msra.mxu0 %v559
    %746 = vmatprep.subr.bf16.mxu0 %v566
    %747 = vmatpush1.bf16.msra.mxu0 %v565
    %748 = vmatprep.subr.bf16.mxu0 %v572
    %749 = vmatpush1.bf16.msra.mxu0 %v571
    %750 = vmatprep.subr.bf16.mxu0 %v578
    %751 = vmatpush1.bf16.msra.mxu0 %v577
    %752 = vmatprep.mubr.bf16.mxu0 %v68
    %753 = vmatmul.mubr.bf16.gmra.mrb[0].mxu0 %v67
    %v754 = vpop.f32.mrb[0].mxu0
    %v755 = vadd.f32 %v178, %v754
    %v756 = vpop.f32.mrb[0].mxu0
    %v757 = vadd.f32 %v182, %v756
    %v758 = vpop.f32.mrb[0].mxu0
    %v759 = vadd.f32 %v178, %v758
    %v760 = vpop.f32.mrb[0].mxu0
    %v761 = vadd.f32 %v182, %v760
    %762 = vdwg.mxu0
    %763 = vmatprep.subr.bf16.mxu0 %v490
    %764 = vmatpush1.bf16.msra.mxu0 %v489
    %765 = vmatprep.subr.bf16.mxu0 %v496
    %766 = vmatpush1.bf16.msra.mxu0 %v495
    %767 = vmatprep.subr.bf16.mxu0 %v502
    %768 = vmatpush1.bf16.msra.mxu0 %v501
    %769 = vmatprep.subr.bf16.mxu0 %v508
    %770 = vmatpush1.bf16.msra.mxu0 %v507
    %771 = vmatprep.subr.bf16.mxu0 %v514
    %772 = vmatpush1.bf16.msra.mxu0 %v513
    %773 = vmatprep.subr.bf16.mxu0 %v520
    %774 = vmatpush1.bf16.msra.mxu0 %v519
    %775 = vmatprep.subr.bf16.mxu0 %v526
    %776 = vmatpush1.bf16.msra.mxu0 %v525
    %777 = vmatprep.subr.bf16.mxu0 %v532
    %778 = vmatpush1.bf16.msra.mxu0 %v531
    %779 = vmatprep.subr.bf16.mxu0 %v538
    %780 = vmatpush1.bf16.msra.mxu0 %v537
    %781 = vmatprep.subr.bf16.mxu0 %v544
    %782 = vmatpush1.bf16.msra.mxu0 %v543
    %783 = vmatprep.subr.bf16.mxu0 %v550
    %784 = vmatpush1.bf16.msra.mxu0 %v549
    %785 = vmatprep.subr.bf16.mxu0 %v556
    %786 = vmatpush1.bf16.msra.mxu0 %v555
    %787 = vmatprep.subr.bf16.mxu0 %v562
    %788 = vmatpush1.bf16.msra.mxu0 %v561
    %789 = vmatprep.subr.bf16.mxu0 %v568
    %790 = vmatpush1.bf16.msra.mxu0 %v567
    %791 = vmatprep.subr.bf16.mxu0 %v574
    %792 = vmatpush1.bf16.msra.mxu0 %v573
    %793 = vmatprep.subr.bf16.mxu0 %v580
    %794 = vmatpush1.bf16.msra.mxu0 %v579
    %795 = vmatprep.mubr.bf16.mxu0 %v68
    %796 = vmatmul.mubr.bf16.gmra.mrb[0].mxu0 %v67
    %v797 = vpop.f32.mrb[0].mxu0
    %v798 = vadd.f32 %v186, %v797
    %v799 = vpop.f32.mrb[0].mxu0
    %v800 = vadd.f32 %v190, %v799
    %v801 = vpop.f32.mrb[0].mxu0
    %v802 = vadd.f32 %v186, %v801
    %v803 = vpop.f32.mrb[0].mxu0
    %v804 = vadd.f32 %v190, %v803
    %805 = vdwg.mxu0
    %v806 = vld [vmem:[#allocation7] sm:$0xff]
    %v807 = vld [vmem:[#allocation7 + $0x8] sm:$0xff]
    %v808 = vld [vmem:[#allocation7 + $0x10] sm:$0xff]
    %v809 = vld [vmem:[#allocation7 + $0x18] sm:$0xff]
    %v810 = vld [vmem:[#allocation7 + $0x20] sm:$0xff]
    %v811 = vld [vmem:[#allocation7 + $0x28] sm:$0xff]
    %v812 = vld [vmem:[#allocation7 + $0x30] sm:$0xff]
    %v813 = vld [vmem:[#allocation7 + $0x38] sm:$0xff]
    %v814 = vld [vmem:[#allocation7 + $0x40] sm:$0xff]
    %v815 = vld [vmem:[#allocation7 + $0x48] sm:$0xff]
    %v816 = vld [vmem:[#allocation7 + $0x50] sm:$0xff]
    %v817 = vld [vmem:[#allocation7 + $0x58] sm:$0xff]
    %v818 = vld [vmem:[#allocation7 + $0x60] sm:$0xff]
    %v819 = vld [vmem:[#allocation7 + $0x68] sm:$0xff]
    %v820 = vld [vmem:[#allocation7 + $0x70] sm:$0xff]
    %v821 = vld [vmem:[#allocation7 + $0x78] sm:$0xff]
    %v822 = vld [vmem:[#allocation7 + $0x80] sm:$0xff]
    %v823 = vld [vmem:[#allocation7 + $0x88] sm:$0xff]
    %v824 = vld [vmem:[#allocation7 + $0x90] sm:$0xff]
    %v825 = vld [vmem:[#allocation7 + $0x98] sm:$0xff]
    %v826 = vld [vmem:[#allocation7 + $0xa0] sm:$0xff]
    %v827 = vld [vmem:[#allocation7 + $0xa8] sm:$0xff]
    %v828 = vld [vmem:[#allocation7 + $0xb0] sm:$0xff]
    %v829 = vld [vmem:[#allocation7 + $0xb8] sm:$0xff]
    %v830 = vld [vmem:[#allocation7 + $0xc0] sm:$0xff]
    %v831 = vld [vmem:[#allocation7 + $0xc8] sm:$0xff]
    %v832 = vld [vmem:[#allocation7 + $0xd0] sm:$0xff]
    %v833 = vld [vmem:[#allocation7 + $0xd8] sm:$0xff]
    %v834 = vld [vmem:[#allocation7 + $0xe0] sm:$0xff]
    %v835 = vld [vmem:[#allocation7 + $0xe8] sm:$0xff]
    %v836 = vld [vmem:[#allocation7 + $0xf0] sm:$0xff]
    %v837 = vld [vmem:[#allocation7 + $0xf8] sm:$0xff]
    %v838 = vld [vmem:[%s4] sm:$0x3]
    %v839 = vpack.c.bf16 %v712, %v712
    %v840 = vpack.c.bf16 %v755, %v755
    %v841 = vpack.c.bf16 %v798, %v798
    %842 = vmatprep.subr.bf16.mxu0 0
    %843 = vmatpush1.bf16.xpose.msra.mxu0 %v840
    %844 = vmatprep.subr.bf16.mxu0 0
    %845 = vmatpush1.bf16.xpose.msra.mxu0 0
    %846 = vmatprep.subr.bf16.mxu0 0
    %847 = vmatpush1.bf16.xpose.msra.mxu0 0
    %848 = vmatprep.subr.bf16.mxu0 0
    %849 = vmatpush1.bf16.xpose.msra.mxu0 0
    %850 = vmatprep.subr.bf16.mxu0 0
    %851 = vmatpush1.bf16.xpose.msra.mxu0 0
    %852 = vmatprep.subr.bf16.mxu0 0
    %853 = vmatpush1.bf16.xpose.msra.mxu0 0
    %854 = vmatprep.subr.bf16.mxu0 0
    %855 = vmatpush1.bf16.xpose.msra.mxu0 0
    %856 = vmatprep.subr.bf16.mxu0 0
    %857 = vmatpush1.bf16.xpose.msra.mxu0 0
    %858 = vmatprep.subr.bf16.mxu0 0
    %859 = vmatpush1.bf16.xpose.msra.mxu0 0
    %860 = vmatprep.subr.bf16.mxu0 0
    %861 = vmatpush1.bf16.xpose.msra.mxu0 0
    %862 = vmatprep.subr.bf16.mxu0 0
    %863 = vmatpush1.bf16.xpose.msra.mxu0 0
    %864 = vmatprep.subr.bf16.mxu0 0
    %865 = vmatpush1.bf16.xpose.msra.mxu0 0
    %866 = vmatprep.subr.bf16.mxu0 0
    %867 = vmatpush1.bf16.xpose.msra.mxu0 0
    %868 = vmatprep.subr.bf16.mxu0 0
    %869 = vmatpush1.bf16.xpose.msra.mxu0 0
    %870 = vmatprep.subr.bf16.mxu0 0
    %871 = vmatpush1.bf16.xpose.msra.mxu0 0
    %872 = vmatprep.subr.bf16.mxu0 0
    %873 = vmatpush1.bf16.xpose.msra.mxu0 0
    %874 = vmatprep.mubr.bf16.mxu0 0
    %875 = vmatmul.mubr.bf16.gmra.mrb[0].mxu0 %v839
    %v876 = vpop.f32.mrb[0].mxu0
    %v877 = vadd.f32 0.0, %v876
    %v878 = vpop.f32.mrb[0].mxu0
    %v879 = vpop.f32.mrb[0].mxu0
    %v880 = vpop.f32.mrb[0].mxu0
    %881 = vdwg.mxu0
    %vm882 = vcmask 64512
    %v883 = vsel %vm882, %v877, -inf
    %884 = vmax.xlane.f32.xlu0 %v883
    %v885 = vpop.xlane.xlu0 %884
    %v886 = vsub.f32 %v877, %v885
    %v887 = vmul.f32 %v886, 1.442695
    %v888 = vpow.pop %v887
    %v889 = vsel %vm882, %v888, 0.0
    %890 = vadd.xlane.f32.xlu0 %v889
    %v891 = vpop.xlane.xlu0 %890
    %v892 = vrcp.pop %v891
    %v893 = vmul.f32 %v888, %v892
    %v894 = vpack.c.bf16 %v893, %v893
    %v896 = vsel %vm882, %v894, 0
    %vm898 = vcmask 1043456
    %v900 = vsel %vm898, %v841, 0
    %902 = vmatprep.subr.bf16.mxu0 0
    %903 = vmatpush1.bf16.msra.mxu0 %v900
    %904 = vmatprep.subr.bf16.mxu0 0
    %905 = vmatpush1.bf16.msra.mxu0 0
    %906 = vmatprep.subr.bf16.mxu0 0
    %907 = vmatpush1.bf16.msra.mxu0 0
    %908 = vmatprep.subr.bf16.mxu0 0
    %909 = vmatpush1.bf16.msra.mxu0 0
    %910 = vmatprep.subr.bf16.mxu0 0
    %911 = vmatpush1.bf16.msra.mxu0 0
    %912 = vmatprep.subr.bf16.mxu0 0
    %913 = vmatpush1.bf16.msra.mxu0 0
    %914 = vmatprep.subr.bf16.mxu0 0
    %915 = vmatpush1.bf16.msra.mxu0 0
    %916 = vmatprep.subr.bf16.mxu0 0
    %917 = vmatpush1.bf16.msra.mxu0 0
    %918 = vmatprep.subr.bf16.mxu0 0
    %919 = vmatpush1.bf16.msra.mxu0 0
    %920 = vmatprep.subr.bf16.mxu0 0
    %921 = vmatpush1.bf16.msra.mxu0 0
    %922 = vmatprep.subr.bf16.mxu0 0
    %923 = vmatpush1.bf16.msra.mxu0 0
    %924 = vmatprep.subr.bf16.mxu0 0
    %925 = vmatpush1.bf16.msra.mxu0 0
    %926 = vmatprep.subr.bf16.mxu0 0
    %927 = vmatpush1.bf16.msra.mxu0 0
    %928 = vmatprep.subr.bf16.mxu0 0
    %929 = vmatpush1.bf16.msra.mxu0 0
    %930 = vmatprep.subr.bf16.mxu0 0
    %931 = vmatpush1.bf16.msra.mxu0 0
    %932 = vmatprep.subr.bf16.mxu0 0
    %933 = vmatpush1.bf16.msra.mxu0 0
    %934 = vmatprep.mubr.bf16.mxu0 0
    %935 = vmatmul.mubr.bf16.gmra.mrb[0].mxu0 %v896
    %v936 = vpop.f32.mrb[0].mxu0
    %v937 = vadd.f32 0.0, %v936
    %v938 = vpop.f32.mrb[0].mxu0
    %v939 = vpop.f32.mrb[0].mxu0
    %v940 = vpop.f32.mrb[0].mxu0
    %941 = vdwg.mxu0
    %v942 = vpack.c.bf16 %v937, %v937
    %v943 = vpack.c.bf16 %v714, %v714
    %v944 = vpack.c.bf16 %v757, %v757
    %v945 = vpack.c.bf16 %v800, %v800
    %946 = vmatprep.subr.bf16.mxu0 0
    %947 = vmatpush1.bf16.xpose.msra.mxu0 %v944
    %948 = vmatprep.subr.bf16.mxu0 0
    %949 = vmatpush1.bf16.xpose.msra.mxu0 0
    %950 = vmatprep.subr.bf16.mxu0 0
    %951 = vmatpush1.bf16.xpose.msra.mxu0 0
    %952 = vmatprep.subr.bf16.mxu0 0
    %953 = vmatpush1.bf16.xpose.msra.mxu0 0
    %954 = vmatprep.subr.bf16.mxu0 0
    %955 = vmatpush1.bf16.xpose.msra.mxu0 0
    %956 = vmatprep.subr.bf16.mxu0 0
    %957 = vmatpush1.bf16.xpose.msra.mxu0 0
    %958 = vmatprep.subr.bf16.mxu0 0
    %959 = vmatpush1.bf16.xpose.msra.mxu0 0
    %960 = vmatprep.subr.bf16.mxu0 0
    %961 = vmatpush1.bf16.xpose.msra.mxu0 0
    %962 = vmatprep.subr.bf16.mxu0 0
    %963 = vmatpush1.bf16.xpose.msra.mxu0 0
    %964 = vmatprep.subr.bf16.mxu0 0
    %965 = vmatpush1.bf16.xpose.msra.mxu0 0
    %966 = vmatprep.subr.bf16.mxu0 0
    %967 = vmatpush1.bf16.xpose.msra.mxu0 0
    %968 = vmatprep.subr.bf16.mxu0 0
    %969 = vmatpush1.bf16.xpose.msra.mxu0 0
    %970 = vmatprep.subr.bf16.mxu0 0
    %971 = vmatpush1.bf16.xpose.msra.mxu0 0
    %972 = vmatprep.subr.bf16.mxu0 0
    %973 = vmatpush1.bf16.xpose.msra.mxu0 0
    %974 = vmatprep.subr.bf16.mxu0 0
    %975 = vmatpush1.bf16.xpose.msra.mxu0 0
    %976 = vmatprep.subr.bf16.mxu0 0
    %977 = vmatpush1.bf16.xpose.msra.mxu0 0
    %978 = vmatprep.mubr.bf16.mxu0 0
    %979 = vmatmul.mubr.bf16.gmra.mrb[0].mxu0 %v943
    %v980 = vpop.f32.mrb[0].mxu0
    %v981 = vadd.f32 0.0, %v980
    %v982 = vpop.f32.mrb[0].mxu0
    %v983 = vpop.f32.mrb[0].mxu0
    %v984 = vpop.f32.mrb[0].mxu0
    %985 = vdwg.mxu0
    %v986 = vsel %vm882, %v981, -inf
    %987 = vmax.xlane.f32.xlu0 %v986
    %v988 = vpop.xlane.xlu0 %987
    %v989 = vsub.f32 %v981, %v988
    %v990 = vmul.f32 %v989, 1.442695
    %v991 = vpow.pop %v990
    %v992 = vsel %vm882, %v991, 0.0
    %993 = vadd.xlane.f32.xlu0 %v992
    %v994 = vpop.xlane.xlu0 %993
    %v995 = vrcp.pop %v994
    %v996 = vmul.f32 %v991, %v995
    %v997 = vpack.c.bf16 %v996, %v996
    %v999 = vsel %vm882, %v997, 0
    %v1002 = vsel %vm898, %v945, 0
    %1004 = vmatprep.subr.bf16.mxu0 0
    %1005 = vmatpush1.bf16.msra.mxu0 %v1002
    %1006 = vmatprep.subr.bf16.mxu0 0
    %1007 = vmatpush1.bf16.msra.mxu0 0
    %1008 = vmatprep.subr.bf16.mxu0 0
    %1009 = vmatpush1.bf16.msra.mxu0 0
    %1010 = vmatprep.subr.bf16.mxu0 0
    %1011 = vmatpush1.bf16.msra.mxu0 0
    %1012 = vmatprep.subr.bf16.mxu0 0
    %1013 = vmatpush1.bf16.msra.mxu0 0
    %1014 = vmatprep.subr.bf16.mxu0 0
    %1015 = vmatpush1.bf16.msra.mxu0 0
    %1016 = vmatprep.subr.bf16.mxu0 0
    %1017 = vmatpush1.bf16.msra.mxu0 0
    %1018 = vmatprep.subr.bf16.mxu0 0
    %1019 = vmatpush1.bf16.msra.mxu0 0
    %1020 = vmatprep.subr.bf16.mxu0 0
    %1021 = vmatpush1.bf16.msra.mxu0 0
    %1022 = vmatprep.subr.bf16.mxu0 0
    %1023 = vmatpush1.bf16.msra.mxu0 0
    %1024 = vmatprep.subr.bf16.mxu0 0
    %1025 = vmatpush1.bf16.msra.mxu0 0
    %1026 = vmatprep.subr.bf16.mxu0 0
    %1027 = vmatpush1.bf16.msra.mxu0 0
    %1028 = vmatprep.subr.bf16.mxu0 0
    %1029 = vmatpush1.bf16.msra.mxu0 0
    %1030 = vmatprep.subr.bf16.mxu0 0
    %1031 = vmatpush1.bf16.msra.mxu0 0
    %1032 = vmatprep.subr.bf16.mxu0 0
    %1033 = vmatpush1.bf16.msra.mxu0 0
    %1034 = vmatprep.subr.bf16.mxu0 0
    %1035 = vmatpush1.bf16.msra.mxu0 0
    %1036 = vmatprep.mubr.bf16.mxu0 0
    %1037 = vmatmul.mubr.bf16.gmra.mrb[0].mxu0 %v999
    %v1038 = vpop.f32.mrb[0].mxu0
    %v1039 = vadd.f32 0.0, %v1038
    %v1040 = vpop.f32.mrb[0].mxu0
    %v1041 = vpop.f32.mrb[0].mxu0
    %v1042 = vpop.f32.mrb[0].mxu0
    %1043 = vdwg.mxu0
    %v1044 = vpack.c.bf16 %v1039, %v1039
    %v1046 = vlaneseq
    %v1047 = vshrl.u32 %v1046, 7
    %v1048 = vsub.s32 0, %v1047
    %v1049 = vrot.slane %v838, %v1048
    %v1050 = vlaneseq
    %v1051 = vshrl.u32 %v1050, 7
    %v1052 = vsub.s32 1, %v1051
    %v1053 = vrot.slane %v838, %v1052
    %v1088 = vunpack.c.l.b16 %v806
    %v1089 = vunpack.c.h.b16 %v806
    %v1090 = vunpack.c.l.b16 %v807
    %v1091 = vunpack.c.h.b16 %v807
    %v1092 = vunpack.c.l.b16 %v808
    %v1093 = vunpack.c.h.b16 %v808
    %v1094 = vunpack.c.l.b16 %v809
    %v1095 = vunpack.c.h.b16 %v809
    %v1096 = vunpack.c.l.b16 %v810
    %v1097 = vunpack.c.h.b16 %v810
    %v1098 = vunpack.c.l.b16 %v811
    %v1099 = vunpack.c.h.b16 %v811
    %v1100 = vunpack.c.l.b16 %v812
    %v1101 = vunpack.c.h.b16 %v812
    %v1102 = vunpack.c.l.b16 %v813
    %v1103 = vunpack.c.h.b16 %v813
    %v1104 = vunpack.c.l.b16 %v814
    %v1105 = vunpack.c.h.b16 %v814
    %v1106 = vunpack.c.l.b16 %v815
    %v1107 = vunpack.c.h.b16 %v815
    %v1108 = vunpack.c.l.b16 %v816
    %v1109 = vunpack.c.h.b16 %v816
    %v1110 = vunpack.c.l.b16 %v817
    %v1111 = vunpack.c.h.b16 %v817
    %v1112 = vunpack.c.l.b16 %v818
    %v1113 = vunpack.c.h.b16 %v818
    %v1114 = vunpack.c.l.b16 %v819
    %v1115 = vunpack.c.h.b16 %v819
    %v1116 = vunpack.c.l.b16 %v820
    %v1117 = vunpack.c.h.b16 %v820
    %v1118 = vunpack.c.l.b16 %v821
    %v1119 = vunpack.c.h.b16 %v821
    %v1120 = vunpack.c.l.b16 %v822
    %v1121 = vunpack.c.h.b16 %v822
    %v1122 = vunpack.c.l.b16 %v823
    %v1123 = vunpack.c.h.b16 %v823
    %v1124 = vunpack.c.l.b16 %v824
    %v1125 = vunpack.c.h.b16 %v824
    %v1126 = vunpack.c.l.b16 %v825
    %v1127 = vunpack.c.h.b16 %v825
    %v1128 = vunpack.c.l.b16 %v826
    %v1129 = vunpack.c.h.b16 %v826
    %v1130 = vunpack.c.l.b16 %v827
    %v1131 = vunpack.c.h.b16 %v827
    %v1132 = vunpack.c.l.b16 %v828
    %v1133 = vunpack.c.h.b16 %v828
    %v1134 = vunpack.c.l.b16 %v829
    %v1135 = vunpack.c.h.b16 %v829
    %v1136 = vunpack.c.l.b16 %v830
    %v1137 = vunpack.c.h.b16 %v830
    %v1138 = vunpack.c.l.b16 %v831
    %v1139 = vunpack.c.h.b16 %v831
    %v1140 = vunpack.c.l.b16 %v832
    %v1141 = vunpack.c.h.b16 %v832
    %v1142 = vunpack.c.l.b16 %v833
    %v1143 = vunpack.c.h.b16 %v833
    %v1144 = vunpack.c.l.b16 %v834
    %v1145 = vunpack.c.h.b16 %v834
    %v1146 = vunpack.c.l.b16 %v835
    %v1147 = vunpack.c.h.b16 %v835
    %v1148 = vunpack.c.l.b16 %v836
    %v1149 = vunpack.c.h.b16 %v836
    %v1150 = vunpack.c.l.b16 %v837
    %v1151 = vunpack.c.h.b16 %v837
    %v1152 = vpack.c.b16 %v1090, %v1088
    %v1153 = vpack.c.b16 %v1091, %v1089
    %v1154 = vpack.c.b16 %v1094, %v1092
    %v1155 = vpack.c.b16 %v1095, %v1093
    %v1156 = vpack.c.b16 %v1098, %v1096
    %v1157 = vpack.c.b16 %v1099, %v1097
    %v1158 = vpack.c.b16 %v1102, %v1100
    %v1159 = vpack.c.b16 %v1103, %v1101
    %v1160 = vpack.c.b16 %v1106, %v1104
    %v1161 = vpack.c.b16 %v1107, %v1105
    %v1162 = vpack.c.b16 %v1110, %v1108
    %v1163 = vpack.c.b16 %v1111, %v1109
    %v1164 = vpack.c.b16 %v1114, %v1112
    %v1165 = vpack.c.b16 %v1115, %v1113
    %v1166 = vpack.c.b16 %v1118, %v1116
    %v1167 = vpack.c.b16 %v1119, %v1117
    %v1168 = vpack.c.b16 %v1122, %v1120
    %v1169 = vpack.c.b16 %v1123, %v1121
    %v1170 = vpack.c.b16 %v1126, %v1124
    %v1171 = vpack.c.b16 %v1127, %v1125
    %v1172 = vpack.c.b16 %v1130, %v1128
    %v1173 = vpack.c.b16 %v1131, %v1129
    %v1174 = vpack.c.b16 %v1134, %v1132
    %v1175 = vpack.c.b16 %v1135, %v1133
    %v1176 = vpack.c.b16 %v1138, %v1136
    %v1177 = vpack.c.b16 %v1139, %v1137
    %v1178 = vpack.c.b16 %v1142, %v1140
    %v1179 = vpack.c.b16 %v1143, %v1141
    %v1180 = vpack.c.b16 %v1146, %v1144
    %v1181 = vpack.c.b16 %v1147, %v1145
    %v1182 = vpack.c.b16 %v1150, %v1148
    %v1183 = vpack.c.b16 %v1151, %v1149
    %1216 = vmatprep.subr.bf16.mxu0 %v1153
    %1217 = vmatpush1.bf16.msra.mxu0 %v1152
    %1218 = vmatprep.subr.bf16.mxu0 %v1155
    %1219 = vmatpush1.bf16.msra.mxu0 %v1154
    %1220 = vmatprep.subr.bf16.mxu0 %v1157
    %1221 = vmatpush1.bf16.msra.mxu0 %v1156
    %1222 = vmatprep.subr.bf16.mxu0 %v1159
    %1223 = vmatpush1.bf16.msra.mxu0 %v1158
    %1224 = vmatprep.subr.bf16.mxu0 %v1161
    %1225 = vmatpush1.bf16.msra.mxu0 %v1160
    %1226 = vmatprep.subr.bf16.mxu0 %v1163
    %1227 = vmatpush1.bf16.msra.mxu0 %v1162
    %1228 = vmatprep.subr.bf16.mxu0 %v1165
    %1229 = vmatpush1.bf16.msra.mxu0 %v1164
    %1230 = vmatprep.subr.bf16.mxu0 %v1167
    %1231 = vmatpush1.bf16.msra.mxu0 %v1166
    %1232 = vmatprep.subr.bf16.mxu0 %v1169
    %1233 = vmatpush1.bf16.msra.mxu0 %v1168
    %1234 = vmatprep.subr.bf16.mxu0 %v1171
    %1235 = vmatpush1.bf16.msra.mxu0 %v1170
    %1236 = vmatprep.subr.bf16.mxu0 %v1173
    %1237 = vmatpush1.bf16.msra.mxu0 %v1172
    %1238 = vmatprep.subr.bf16.mxu0 %v1175
    %1239 = vmatpush1.bf16.msra.mxu0 %v1174
    %1240 = vmatprep.subr.bf16.mxu0 %v1177
    %1241 = vmatpush1.bf16.msra.mxu0 %v1176
    %1242 = vmatprep.subr.bf16.mxu0 %v1179
    %1243 = vmatpush1.bf16.msra.mxu0 %v1178
    %1244 = vmatprep.subr.bf16.mxu0 %v1181
    %1245 = vmatpush1.bf16.msra.mxu0 %v1180
    %1246 = vmatprep.subr.bf16.mxu0 %v1183
    %1247 = vmatpush1.bf16.msra.mxu0 %v1182
    %1248 = vmatprep.mubr.bf16.mxu0 %v1044
    %1249 = vmatmul.mubr.bf16.gmra.mrb[0].mxu0 %v942
    %v1250 = vpop.f32.mrb[0].mxu0
    %v1251 = vadd.f32 %v1049, %v1250
    %v1252 = vpop.f32.mrb[0].mxu0
    %v1253 = vadd.f32 %v1053, %v1252
    %v1254 = vpop.f32.mrb[0].mxu0
    %v1255 = vpop.f32.mrb[0].mxu0
    %1256 = vdwg.mxu0
    %1257 = vst [vmem:[#allocation8] sm:$0xff] %v1251
    %1258 = vst [vmem:[#allocation8 + $0x8] sm:$0xff] %v1253
    %v1259 = vpack.c.bf16 %v716, %v716
    %v1260 = vpack.c.bf16 %v759, %v759
    %v1261 = vpack.c.bf16 %v802, %v802
    %1262 = vmatprep.subr.bf16.mxu0 0
    %1263 = vmatpush1.bf16.xpose.msra.mxu0 %v1260
    %1264 = vmatprep.subr.bf16.mxu0 0
    %1265 = vmatpush1.bf16.xpose.msra.mxu0 0
    %1266 = vmatprep.subr.bf16.mxu0 0
    %1267 = vmatpush1.bf16.xpose.msra.mxu0 0
    %1268 = vmatprep.subr.bf16.mxu0 0
    %1269 = vmatpush1.bf16.xpose.msra.mxu0 0
    %1270 = vmatprep.subr.bf16.mxu0 0
    %1271 = vmatpush1.bf16.xpose.msra.mxu0 0
    %1272 = vmatprep.subr.bf16.mxu0 0
    %1273 = vmatpush1.bf16.xpose.msra.mxu0 0
    %1274 = vmatprep.subr.bf16.mxu0 0
    %1275 = vmatpush1.bf16.xpose.msra.mxu0 0
    %1276 = vmatprep.subr.bf16.mxu0 0
    %1277 = vmatpush1.bf16.xpose.msra.mxu0 0
    %1278 = vmatprep.subr.bf16.mxu0 0
    %1279 = vmatpush1.bf16.xpose.msra.mxu0 0
    %1280 = vmatprep.subr.bf16.mxu0 0
    %1281 = vmatpush1.bf16.xpose.msra.mxu0 0
    %1282 = vmatprep.subr.bf16.mxu0 0
    %1283 = vmatpush1.bf16.xpose.msra.mxu0 0
    %1284 = vmatprep.subr.bf16.mxu0 0
    %1285 = vmatpush1.bf16.xpose.msra.mxu0 0
    %1286 = vmatprep.subr.bf16.mxu0 0
    %1287 = vmatpush1.bf16.xpose.msra.mxu0 0
    %1288 = vmatprep.subr.bf16.mxu0 0
    %1289 = vmatpush1.bf16.xpose.msra.mxu0 0
    %1290 = vmatprep.subr.bf16.mxu0 0
    %1291 = vmatpush1.bf16.xpose.msra.mxu0 0
    %1292 = vmatprep.subr.bf16.mxu0 0
    %1293 = vmatpush1.bf16.xpose.msra.mxu0 0
    %1294 = vmatprep.mubr.bf16.mxu0 0
    %1295 = vmatmul.mubr.bf16.gmra.mrb[0].mxu0 %v1259
    %v1296 = vpop.f32.mrb[0].mxu0
    %v1297 = vadd.f32 0.0, %v1296
    %v1298 = vpop.f32.mrb[0].mxu0
    %v1299 = vpop.f32.mrb[0].mxu0
    %v1300 = vpop.f32.mrb[0].mxu0
    %1301 = vdwg.mxu0
    %v1302 = vsel %vm882, %v1297, -inf
    %1303 = vmax.xlane.f32.xlu0 %v1302
    %v1304 = vpop.xlane.xlu0 %1303
    %v1305 = vsub.f32 %v1297, %v1304
    %v1306 = vmul.f32 %v1305, 1.442695
    %v1307 = vpow.pop %v1306
    %v1308 = vsel %vm882, %v1307, 0.0
    %1309 = vadd.xlane.f32.xlu0 %v1308
    %v1310 = vpop.xlane.xlu0 %1309
    %v1311 = vrcp.pop %v1310
    %v1312 = vmul.f32 %v1307, %v1311
    %v1313 = vpack.c.bf16 %v1312, %v1312
    %v1315 = vsel %vm882, %v1313, 0
    %v1318 = vsel %vm898, %v1261, 0
    %1320 = vmatprep.subr.bf16.mxu0 0
    %1321 = vmatpush1.bf16.msra.mxu0 %v1318
    %1322 = vmatprep.subr.bf16.mxu0 0
    %1323 = vmatpush1.bf16.msra.mxu0 0
    %1324 = vmatprep.subr.bf16.mxu0 0
    %1325 = vmatpush1.bf16.msra.mxu0 0
    %1326 = vmatprep.subr.bf16.mxu0 0
    %1327 = vmatpush1.bf16.msra.mxu0 0
    %1328 = vmatprep.subr.bf16.mxu0 0
    %1329 = vmatpush1.bf16.msra.mxu0 0
    %1330 = vmatprep.subr.bf16.mxu0 0
    %1331 = vmatpush1.bf16.msra.mxu0 0
    %1332 = vmatprep.subr.bf16.mxu0 0
    %1333 = vmatpush1.bf16.msra.mxu0 0
    %1334 = vmatprep.subr.bf16.mxu0 0
    %1335 = vmatpush1.bf16.msra.mxu0 0
    %1336 = vmatprep.subr.bf16.mxu0 0
    %1337 = vmatpush1.bf16.msra.mxu0 0
    %1338 = vmatprep.subr.bf16.mxu0 0
    %1339 = vmatpush1.bf16.msra.mxu0 0
    %1340 = vmatprep.subr.bf16.mxu0 0
    %1341 = vmatpush1.bf16.msra.mxu0 0
    %1342 = vmatprep.subr.bf16.mxu0 0
    %1343 = vmatpush1.bf16.msra.mxu0 0
    %1344 = vmatprep.subr.bf16.mxu0 0
    %1345 = vmatpush1.bf16.msra.mxu0 0
    %1346 = vmatprep.subr.bf16.mxu0 0
    %1347 = vmatpush1.bf16.msra.mxu0 0
    %1348 = vmatprep.subr.bf16.mxu0 0
    %1349 = vmatpush1.bf16.msra.mxu0 0
    %1350 = vmatprep.subr.bf16.mxu0 0
    %1351 = vmatpush1.bf16.msra.mxu0 0
    %1352 = vmatprep.mubr.bf16.mxu0 0
    %1353 = vmatmul.mubr.bf16.gmra.mrb[0].mxu0 %v1315
    %v1354 = vpop.f32.mrb[0].mxu0
    %v1355 = vadd.f32 0.0, %v1354
    %v1356 = vpop.f32.mrb[0].mxu0
    %v1357 = vpop.f32.mrb[0].mxu0
    %v1358 = vpop.f32.mrb[0].mxu0
    %1359 = vdwg.mxu0
    %v1360 = vpack.c.bf16 %v1355, %v1355
    %v1361 = vpack.c.bf16 %v718, %v718
    %v1362 = vpack.c.bf16 %v761, %v761
    %v1363 = vpack.c.bf16 %v804, %v804
    %1364 = vmatprep.subr.bf16.mxu0 0
    %1365 = vmatpush1.bf16.xpose.msra.mxu0 %v1362
    %1366 = vmatprep.subr.bf16.mxu0 0
    %1367 = vmatpush1.bf16.xpose.msra.mxu0 0
    %1368 = vmatprep.subr.bf16.mxu0 0
    %1369 = vmatpush1.bf16.xpose.msra.mxu0 0
    %1370 = vmatprep.subr.bf16.mxu0 0
    %1371 = vmatpush1.bf16.xpose.msra.mxu0 0
    %1372 = vmatprep.subr.bf16.mxu0 0
    %1373 = vmatpush1.bf16.xpose.msra.mxu0 0
    %1374 = vmatprep.subr.bf16.mxu0 0
    %1375 = vmatpush1.bf16.xpose.msra.mxu0 0
    %1376 = vmatprep.subr.bf16.mxu0 0
    %1377 = vmatpush1.bf16.xpose.msra.mxu0 0
    %1378 = vmatprep.subr.bf16.mxu0 0
    %1379 = vmatpush1.bf16.xpose.msra.mxu0 0
    %1380 = vmatprep.subr.bf16.mxu0 0
    %1381 = vmatpush1.bf16.xpose.msra.mxu0 0
    %1382 = vmatprep.subr.bf16.mxu0 0
    %1383 = vmatpush1.bf16.xpose.msra.mxu0 0
    %1384 = vmatprep.subr.bf16.mxu0 0
    %1385 = vmatpush1.bf16.xpose.msra.mxu0 0
    %1386 = vmatprep.subr.bf16.mxu0 0
    %1387 = vmatpush1.bf16.xpose.msra.mxu0 0
    %1388 = vmatprep.subr.bf16.mxu0 0
    %1389 = vmatpush1.bf16.xpose.msra.mxu0 0
    %1390 = vmatprep.subr.bf16.mxu0 0
    %1391 = vmatpush1.bf16.xpose.msra.mxu0 0
    %1392 = vmatprep.subr.bf16.mxu0 0
    %1393 = vmatpush1.bf16.xpose.msra.mxu0 0
    %1394 = vmatprep.subr.bf16.mxu0 0
    %1395 = vmatpush1.bf16.xpose.msra.mxu0 0
    %1396 = vmatprep.mubr.bf16.mxu0 0
    %1397 = vmatmul.mubr.bf16.gmra.mrb[0].mxu0 %v1361
    %v1398 = vpop.f32.mrb[0].mxu0
    %v1399 = vadd.f32 0.0, %v1398
    %v1400 = vpop.f32.mrb[0].mxu0
    %v1401 = vpop.f32.mrb[0].mxu0
    %v1402 = vpop.f32.mrb[0].mxu0
    %1403 = vdwg.mxu0
    %v1404 = vsel %vm882, %v1399, -inf
    %1405 = vmax.xlane.f32.xlu0 %v1404
    %v1406 = vpop.xlane.xlu0 %1405
    %v1407 = vsub.f32 %v1399, %v1406
    %v1408 = vmul.f32 %v1407, 1.442695
    %v1409 = vpow.pop %v1408
    %v1410 = vsel %vm882, %v1409, 0.0
    %1411 = vadd.xlane.f32.xlu0 %v1410
    %v1412 = vpop.xlane.xlu0 %1411
    %v1413 = vrcp.pop %v1412
    %v1414 = vmul.f32 %v1409, %v1413
    %v1415 = vpack.c.bf16 %v1414, %v1414
    %v1417 = vsel %vm882, %v1415, 0
    %v1420 = vsel %vm898, %v1363, 0
    %1422 = vmatprep.subr.bf16.mxu0 0
    %1423 = vmatpush1.bf16.msra.mxu0 %v1420
    %1424 = vmatprep.subr.bf16.mxu0 0
    %1425 = vmatpush1.bf16.msra.mxu0 0
    %1426 = vmatprep.subr.bf16.mxu0 0
    %1427 = vmatpush1.bf16.msra.mxu0 0
    %1428 = vmatprep.subr.bf16.mxu0 0
    %1429 = vmatpush1.bf16.msra.mxu0 0
    %1430 = vmatprep.subr.bf16.mxu0 0
    %1431 = vmatpush1.bf16.msra.mxu0 0
    %1432 = vmatprep.subr.bf16.mxu0 0
    %1433 = vmatpush1.bf16.msra.mxu0 0
    %1434 = vmatprep.subr.bf16.mxu0 0
    %1435 = vmatpush1.bf16.msra.mxu0 0
    %1436 = vmatprep.subr.bf16.mxu0 0
    %1437 = vmatpush1.bf16.msra.mxu0 0
    %1438 = vmatprep.subr.bf16.mxu0 0
    %1439 = vmatpush1.bf16.msra.mxu0 0
    %1440 = vmatprep.subr.bf16.mxu0 0
    %1441 = vmatpush1.bf16.msra.mxu0 0
    %1442 = vmatprep.subr.bf16.mxu0 0
    %1443 = vmatpush1.bf16.msra.mxu0 0
    %1444 = vmatprep.subr.bf16.mxu0 0
    %1445 = vmatpush1.bf16.msra.mxu0 0
    %1446 = vmatprep.subr.bf16.mxu0 0
    %1447 = vmatpush1.bf16.msra.mxu0 0
    %1448 = vmatprep.subr.bf16.mxu0 0
    %1449 = vmatpush1.bf16.msra.mxu0 0
    %1450 = vmatprep.subr.bf16.mxu0 0
    %1451 = vmatpush1.bf16.msra.mxu0 0
    %1452 = vmatprep.subr.bf16.mxu0 0
    %1453 = vmatpush1.bf16.msra.mxu0 0
    %1454 = vmatprep.mubr.bf16.mxu0 0
    %1455 = vmatmul.mubr.bf16.gmra.mrb[0].mxu0 %v1417
    %v1456 = vpop.f32.mrb[0].mxu0
    %v1457 = vadd.f32 0.0, %v1456
    %v1458 = vpop.f32.mrb[0].mxu0
    %v1459 = vpop.f32.mrb[0].mxu0
    %v1460 = vpop.f32.mrb[0].mxu0
    %1461 = vdwg.mxu0
    %v1462 = vpack.c.bf16 %v1457, %v1457
    %1463 = vmatprep.subr.bf16.mxu0 %v1153
    %1464 = vmatpush1.bf16.msra.mxu0 %v1152
    %1465 = vmatprep.subr.bf16.mxu0 %v1155
    %1466 = vmatpush1.bf16.msra.mxu0 %v1154
    %1467 = vmatprep.subr.bf16.mxu0 %v1157
    %1468 = vmatpush1.bf16.msra.mxu0 %v1156
    %1469 = vmatprep.subr.bf16.mxu0 %v1159
    %1470 = vmatpush1.bf16.msra.mxu0 %v1158
    %1471 = vmatprep.subr.bf16.mxu0 %v1161
    %1472 = vmatpush1.bf16.msra.mxu0 %v1160
    %1473 = vmatprep.subr.bf16.mxu0 %v1163
    %1474 = vmatpush1.bf16.msra.mxu0 %v1162
    %1475 = vmatprep.subr.bf16.mxu0 %v1165
    %1476 = vmatpush1.bf16.msra.mxu0 %v1164
    %1477 = vmatprep.subr.bf16.mxu0 %v1167
    %1478 = vmatpush1.bf16.msra.mxu0 %v1166
    %1479 = vmatprep.subr.bf16.mxu0 %v1169
    %1480 = vmatpush1.bf16.msra.mxu0 %v1168
    %1481 = vmatprep.subr.bf16.mxu0 %v1171
    %1482 = vmatpush1.bf16.msra.mxu0 %v1170
    %1483 = vmatprep.subr.bf16.mxu0 %v1173
    %1484 = vmatpush1.bf16.msra.mxu0 %v1172
    %1485 = vmatprep.subr.bf16.mxu0 %v1175
    %1486 = vmatpush1.bf16.msra.mxu0 %v1174
    %1487 = vmatprep.subr.bf16.mxu0 %v1177
    %1488 = vmatpush1.bf16.msra.mxu0 %v1176
    %1489 = vmatprep.subr.bf16.mxu0 %v1179
    %1490 = vmatpush1.bf16.msra.mxu0 %v1178
    %1491 = vmatprep.subr.bf16.mxu0 %v1181
    %1492 = vmatpush1.bf16.msra.mxu0 %v1180
    %1493 = vmatprep.subr.bf16.mxu0 %v1183
    %1494 = vmatpush1.bf16.msra.mxu0 %v1182
    %1495 = vmatprep.mubr.bf16.mxu0 %v1462
    %1496 = vmatmul.mubr.bf16.gmra.mrb[0].mxu0 %v1360
    %v1497 = vpop.f32.mrb[0].mxu0
    %v1498 = vadd.f32 %v1049, %v1497
    %v1499 = vpop.f32.mrb[0].mxu0
    %v1500 = vadd.f32 %v1053, %v1499
    %v1501 = vpop.f32.mrb[0].mxu0
    %v1502 = vpop.f32.mrb[0].mxu0
    %1503 = vdwg.mxu0
    %1504 = vst [vmem:[#allocation8 + $0x10] sm:$0xff] %v1498
    %1505 = vst [vmem:[#allocation8 + $0x18] sm:$0xff] %v1500
    // Predicated region
    $region34: #{tpu_custom_call.1} parent=1 // pred_check
      _
    $region35: #{tpu_custom_call.1} parent=1 // pred_check_branch
      %1507 = sbr.rel (0) target = $region37
    $region36: #{tpu_custom_call.1} parent=1 // pred_region
      %s1509 = ssub.s32 512, 512
      %1510 = vsyncadd [#allocation4], %s1509
      %s1512 = sshll.u32 [#allocation8], 4
      %s1513 = int_to_ptr.vmem [resolvable:$true] %s1512
      %1515 = dma.vmem_to_hbm [thread:$0]  %s1513, 512, %s5, [#allocation4]
    $region37: #{tpu_custom_call.1} parent=1 // pred_fallthru
      _
    // Predicated region
    $region38: #{tpu_custom_call.1} parent=1 // pred_check
      _
    $region39: #{tpu_custom_call.1} parent=1 // pred_check_branch
      %1517 = sbr.rel (0) target = $region41
    $region40: #{tpu_custom_call.1} parent=1 // pred_region
      %1518 = dma.done [#allocation4], 512
    $region41: #{tpu_custom_call.1} parent=1 // pred_fallthru
      _
    %1519 = vsyncpa [#allocation3], 1
    %1520 = vsyncpa [#allocation6], 1
    %1521 = vsyncpa [#allocation4], 1

</llo_original>
